<compile_context>
chip_gen: v7x
topology: tpu7x:2x2x1
jax: 0.10.0
libtpu: 0.0.40
codegen_flags: <defaults>
</compile_context>

<pallas_src>
import math

import jax
import jax.numpy as jnp
from jax.experimental import pallas as pl
from jax.experimental.pallas import tpu as pltpu

_MIB = 1024 * 1024


# ---------------------------------------------------------------------------
# Kernel bodies
# ---------------------------------------------------------------------------

def _swiglu_accum(x, w1_ref, w2_ref, w3_ref, acc_ref):
    """acc += (silu(x @ w1_tile) * (x @ w3_tile)) @ w2_tile for one hidden tile."""
    w1 = w1_ref[0]                                                     # (D, th)
    w3 = w3_ref[0]                                                     # (D, th)
    w2 = w2_ref[0]                                                     # (th, D)
    h1 = jnp.dot(x, w1, preferred_element_type=jnp.float32)            # (tn, th)
    h3 = jnp.dot(x, w3, preferred_element_type=jnp.float32)            # (tn, th)
    h = (h1 * jax.nn.sigmoid(h1)) * h3                                 # SwiGLU, f32
    acc_ref[...] += jnp.dot(h.astype(w2.dtype), w2,
                            preferred_element_type=jnp.float32)


def _kernel_cast(x_ref, w1_ref, w2_ref, w3_ref, o_ref, acc_ref, xw_ref):
    """Variant when activation dtype != weight dtype.

    The (tn, D) token tile is cast to the weight/compute dtype exactly once per
    (expert, token-tile) — at the first hidden step — into a VMEM scratch, and
    that scratch is reused by every hidden step (no per-step full-tile cast).
    """
    h_idx = pl.program_id(2)

    @pl.when(h_idx == 0)
    def _():
        acc_ref[...] = jnp.zeros_like(acc_ref)
        xw_ref[...] = x_ref[0].astype(xw_ref.dtype)

    _swiglu_accum(xw_ref[...], w1_ref, w2_ref, w3_ref, acc_ref)

    @pl.when(h_idx == pl.num_programs(2) - 1)
    def _():
        o_ref[0] = acc_ref[...].astype(o_ref.dtype)


def _kernel_nocast(x_ref, w1_ref, w2_ref, w3_ref, o_ref, acc_ref):
    """Variant when activation dtype already matches the weights (no cast scratch)."""
    h_idx = pl.program_id(2)

    @pl.when(h_idx == 0)
    def _():
        acc_ref[...] = jnp.zeros_like(acc_ref)

    _swiglu_accum(x_ref[0], w1_ref, w2_ref, w3_ref, acc_ref)

    @pl.when(h_idx == pl.num_programs(2) - 1)
    def _():
        o_ref[0] = acc_ref[...].astype(o_ref.dtype)


# ---------------------------------------------------------------------------
# Tile selection / VMEM budgeting
# ---------------------------------------------------------------------------

def _vmem_capacity_bytes():
    """Physical per-core VMEM, with a conservative (v7x-sized) fallback."""
    try:
        info = pltpu.get_tpu_info()
        cap = int(getattr(info, "vmem_capacity_bytes", 0) or 0)
        if cap > 0:
            return cap
    except Exception:
        pass
    return 64 * _MIB


def _vmem_usage_bytes(tn, th, D, x_isz, o_isz, w_isz, needs_cast):
    """Estimated VMEM footprint of the pipelined kernel for a given tiling."""
    # x and out are double-buffered by the pipeline; acc is an f32 scratch.
    resident = tn * D * (2 * x_isz + 2 * o_isz + 4)
    if needs_cast:
        resident += tn * D * w_isz              # hoisted-cast scratch
    streamed = 2 * (3 * D * th) * w_isz         # w1/w2/w3, double-buffered
    return resident + streamed


def _select_tiles(N, D, H, E, x_isz, o_isz, w_isz, needs_cast, budget):
    """Pick (tn, th), largest token tile first (tn is the arithmetic-intensity knob)."""
    tn_cands = []
    # Prefer tn == N (weights read from HBM only H/th times total), but only lead
    # with it when there are >= 2 local experts so both v7x TensorCores get work.
    if E >= 2:
        tn_cands.append(N)
    for c in (2048, 1024, 512, 256, 128):
        if c < N and N % c == 0:
            tn_cands.append(c)
    if N not in tn_cands:
        tn_cands.append(N)

    th_cands = [c for c in (512, 256, 128) if c <= H and H % c == 0] or [H]

    for tn in tn_cands:
        for th in th_cands:
            if _vmem_usage_bytes(tn, th, D, x_isz, o_isz, w_isz, needs_cast) <= budget:
                return tn, th
    return tn_cands[-1], th_cands[-1]


# ---------------------------------------------------------------------------
# Public forward
# ---------------------------------------------------------------------------

def moe_mlp_forward(x, w1, w2, w3, *, tn=None, th=None, vmem_budget_bytes=None):
    """x: (E, N, D); w1/w3: (E, D, H); w2: (E, H, D) -> (E, N, D) in x.dtype."""
    E, N, D = x.shape
    H = w1.shape[-1]
    if w1.shape != (E, D, H) or w3.shape != (E, D, H) or w2.shape != (E, H, D):
        raise ValueError(f"inconsistent weight shapes: {w1.shape} {w2.shape} {w3.shape}")

    og_dtype = x.dtype
    w_dtype = w1.dtype
    needs_cast = og_dtype != w_dtype

    x_isz = jnp.dtype(og_dtype).itemsize
    o_isz = x_isz
    w_isz = jnp.dtype(w_dtype).itemsize

    # ~80% of physical VMEM: ~51 MiB on v7x (64 MiB/TC), ~102 MiB on v5e/v6e (128 MiB).
    if vmem_budget_bytes is None:
        vmem_budget_bytes = int(_vmem_capacity_bytes() * 0.8)

    auto_tn, auto_th = _select_tiles(N, D, H, E, x_isz, o_isz, w_isz, needs_cast,
                                     vmem_budget_bytes)
    tn = auto_tn if tn is None else tn
    th = auto_th if th is None else th
    if N % tn != 0:
        raise ValueError(f"token tile tn={tn} must evenly divide N={N}")
    if H % th != 0:
        raise ValueError(f"hidden tile th={th} must evenly divide hidden_size={H}")

    grid = (E, N // tn, H // th)
    n_token_tiles = N // tn

    # Weights are re-streamed once per token tile -> account for the re-reads.
    cost = pl.CostEstimate(
        flops=6 * E * N * D * H,                       # three matmuls, 2*N*D*H each
        transcendentals=E * N * H,                     # sigmoid
        bytes_accessed=E * (3 * D * H * w_isz * n_token_tiles
                            + N * D * (x_isz + o_isz)),
    )

    scratch_shapes = [pltpu.VMEM((tn, D), jnp.float32)]      # f32 accumulator
    if needs_cast:
        scratch_shapes.append(pltpu.VMEM((tn, D), w_dtype))  # hoisted-cast x tile
        kernel = _kernel_cast
    else:
        kernel = _kernel_nocast

    usage = _vmem_usage_bytes(tn, th, D, x_isz, o_isz, w_isz, needs_cast)
    vmem_limit = max(vmem_budget_bytes, usage + 8 * _MIB)

    out = pl.pallas_call(
        kernel,
        out_shape=jax.ShapeDtypeStruct((E, N, D), og_dtype),
        grid_spec=pltpu.PrefetchScalarGridSpec(
            num_scalar_prefetch=0,
            grid=grid,
            in_specs=[
                pl.BlockSpec((1, tn, D), lambda e, n, h: (e, n, 0)),  # x (H-resident)
                pl.BlockSpec((1, D, th), lambda e, n, h: (e, 0, h)),  # w1 (streamed)
                pl.BlockSpec((1, th, D), lambda e, n, h: (e, h, 0)),  # w2 (streamed)
                pl.BlockSpec((1, D, th), lambda e, n, h: (e, 0, h)),  # w3 (streamed)
            ],
            out_specs=pl.BlockSpec((1, tn, D), lambda e, n, h: (e, n, 0)),
            scratch_shapes=scratch_shapes,
        ),
        compiler_params=pltpu.CompilerParams(
            dimension_semantics=("parallel", "parallel", "arbitrary"),
            vmem_limit_bytes=int(vmem_limit),
        ),
        cost_estimate=cost,
    )(x, w1, w2, w3)

    return out

# TODO(synk): expert-parallel / tensor-parallel sharding (apply_ep/apply_tp,
# DeviceMesh/distribute_tensor) and gradient scaling are distributed-training
# concerns with no single-device Pallas equivalent; only the local-expert
# forward pass is implemented here.


# ---------------------------------------------------------------------------
# Reference + test harness
# ---------------------------------------------------------------------------

def _kaiming_uniform(key, shape2d, dtype=jnp.float32):
    """Mimic torch.nn.init.kaiming_uniform_(w, a=sqrt(5)) on a 2D tensor."""
    fan_in = shape2d[1]
    gain = math.sqrt(2.0 / (1.0 + 5.0))          # a = sqrt(5)
    bound = gain * math.sqrt(3.0 / fan_in)
    return jax.random.uniform(key, shape2d, dtype=dtype, minval=-bound, maxval=bound)


def _reference(x, w1, w2, w3):
    xf = x.astype(jnp.float32)
    h1 = jnp.einsum("end,edh->enh", xf, w1.astype(jnp.float32))
    h3 = jnp.einsum("end,edh->enh", xf, w3.astype(jnp.float32))
    h = (h1 * jax.nn.sigmoid(h1)) * h3
    return jnp.einsum("enh,ehd->end", h, w2.astype(jnp.float32))


if __name__ == "__main__":
    # Small but lane-dense (multiples of 128) shapes, consistent with MoEMLP.
    num_experts = 2
    N = 128            # tokens per (local) expert
    d_model = 128
    hidden_size = 256
    dtype = jnp.float32

    key = jax.random.PRNGKey(0)
    k_x, k1, k2, k3 = jax.random.split(key, 4)

    # Parameters are created as (E*d_model, hidden) etc. in the module, then
    # viewed as (E, d_model, hidden) / (E, hidden, d_model) in forward().
    w1 = _kaiming_uniform(k1, (num_experts * d_model, hidden_size), dtype).reshape(
        num_experts, d_model, hidden_size)
    w2 = _kaiming_uniform(k2, (num_experts * hidden_size, d_model), dtype).reshape(
        num_experts, hidden_size, d_model)
    w3 = _kaiming_uniform(k3, (num_experts * d_model, hidden_size), dtype).reshape(
        num_experts, d_model, hidden_size)

    x = jax.random.normal(k_x, (num_experts, N, d_model), dtype=dtype)

    ref = _reference(x, w1, w2, w3).astype(dtype)

    # 1) Auto-selected tiles (tn == N, th chosen from the VMEM budget).
    out = jax.block_until_ready(moe_mlp_forward(x, w1, w2, w3))
    assert out.shape == (num_experts, N, d_model), out.shape
    assert out.dtype == x.dtype, out.dtype
    assert jnp.allclose(out, ref, atol=1e-4, rtol=1e-4), float(jnp.max(jnp.abs(out - ref)))

    # 2) Forced th=128 to exercise the multi-step hidden-axis accumulation path.
    out_acc = jax.block_until_ready(moe_mlp_forward(x, w1, w2, w3, th=128))
    assert jnp.allclose(out_acc, ref, atol=1e-4, rtol=1e-4), float(
        jnp.max(jnp.abs(out_acc - ref)))

    # 3) bf16-weight smoke run (production path: hoisted f32->bf16 activation cast,
    #    bf16 MXU matmuls, f32 accumulate, output written back in x.dtype).
    out_bf16 = jax.block_until_ready(
        moe_mlp_forward(x, w1.astype(jnp.bfloat16), w2.astype(jnp.bfloat16),
                        w3.astype(jnp.bfloat16), th=128))
    assert out_bf16.shape == (num_experts, N, d_model)
    assert out_bf16.dtype == x.dtype
    assert bool(jnp.all(jnp.isfinite(out_bf16)))
    assert jnp.allclose(out_bf16, ref, atol=0.2, rtol=0.1)

    print("KERNEL_OK")
</pallas_src>

<mosaic_0001>
module attributes {stable_mosaic.version = 11 : i64} {
  func.func @_kernel_nocast(%arg0: i32, %arg1: i32, %arg2: i32, %arg3: memref<1x128x128xf32, #tpu.memory_space<vmem>>, %arg4: memref<1x128x256xf32, #tpu.memory_space<vmem>>, %arg5: memref<1x256x128xf32, #tpu.memory_space<vmem>>, %arg6: memref<1x128x256xf32, #tpu.memory_space<vmem>>, %arg7: memref<1x128x128xf32, #tpu.memory_space<vmem>>, %arg8: memref<128x128xf32, #tpu.memory_space<vmem>>) attributes {dimension_semantics = [#tpu.dimension_semantics<parallel>, #tpu.dimension_semantics<parallel>, #tpu.dimension_semantics<arbitrary>], iteration_bounds = array<i64: 2, 1, 1>, scalar_prefetch = 0 : i64, scratch_operands = 1 : i64, tpu.core_type = #tpu.core_type<tc>, window_params = [{transform_indices = @transform_0, window_bounds = array<i64: 1, 128, 128>}, {transform_indices = @transform_1, window_bounds = array<i64: 1, 128, 256>}, {transform_indices = @transform_2, window_bounds = array<i64: 1, 256, 128>}, {transform_indices = @transform_3, window_bounds = array<i64: 1, 128, 256>}, {transform_indices = @transform_4, window_bounds = array<i64: 1, 128, 128>}]} {
    %c0_i32 = arith.constant 0 : i32
    %0 = arith.cmpi eq, %arg2, %c0_i32 : i32
    %1 = arith.extui %0 : i1 to i32
    %c0_i32_0 = arith.constant 0 : i32
    %2 = arith.cmpi ne, %1, %c0_i32_0 : i32
    scf.if %2 {
      %cst_21 = arith.constant 0.000000e+00 : f32
      %27 = vector.broadcast %cst_21 : f32 to vector<128x128xf32>
      %c0_22 = arith.constant 0 : index
      %c0_23 = arith.constant 0 : index
      %28 = vector.load %arg8[%c0_22, %c0_23] : memref<128x128xf32, #tpu.memory_space<vmem>>, vector<128x128xf32>
      tpu.vector_store %arg8[%c0_22, %c0_23], %27 {strides = array<i32>} : memref<128x128xf32, #tpu.memory_space<vmem>>, vector<128x128xf32>,
    } else {
    }
    %c0 = arith.constant 0 : index
    %c0_1 = arith.constant 0 : index
    %c0_2 = arith.constant 0 : index
    %3 = vector.load %arg3[%c0, %c0_1, %c0_2] : memref<1x128x128xf32, #tpu.memory_space<vmem>>, vector<1x128x128xf32>
    %4 = vector.shape_cast %3 : vector<1x128x128xf32> to vector<128x128xf32>
    %c0_3 = arith.constant 0 : index
    %c0_4 = arith.constant 0 : index
    %c0_5 = arith.constant 0 : index
    %5 = vector.load %arg4[%c0_3, %c0_4, %c0_5] : memref<1x128x256xf32, #tpu.memory_space<vmem>>, vector<1x128x256xf32>
    %6 = vector.shape_cast %5 : vector<1x128x256xf32> to vector<128x256xf32>
    %c0_6 = arith.constant 0 : index
    %c0_7 = arith.constant 0 : index
    %c0_8 = arith.constant 0 : index
    %7 = vector.load %arg6[%c0_6, %c0_7, %c0_8] : memref<1x128x256xf32, #tpu.memory_space<vmem>>, vector<1x128x256xf32>
    %8 = vector.shape_cast %7 : vector<1x128x256xf32> to vector<128x256xf32>
    %c0_9 = arith.constant 0 : index
    %c0_10 = arith.constant 0 : index
    %c0_11 = arith.constant 0 : index
    %9 = vector.load %arg5[%c0_9, %c0_10, %c0_11] : memref<1x256x128xf32, #tpu.memory_space<vmem>>, vector<1x256x128xf32>
    %10 = vector.shape_cast %9 : vector<1x256x128xf32> to vector<256x128xf32>
    %cst = arith.constant dense<0.000000e+00> : vector<128x256xf32>
    %11 = tpu.matmul %4, %6, %cst {dimension_numbers = #tpu.dot_dimension_numbers<[1], [0], [0], [1], [0, 0, 1, 1], [], []>} : vector<128x128xf32>, vector<128x256xf32>, vector<128x256xf32> -> vector<128x256xf32>
    %cst_12 = arith.constant dense<0.000000e+00> : vector<128x256xf32>
    %12 = tpu.matmul %4, %8, %cst_12 {dimension_numbers = #tpu.dot_dimension_numbers<[1], [0], [0], [1], [0, 0, 1, 1], [], []>} : vector<128x128xf32>, vector<128x256xf32>, vector<128x256xf32> -> vector<128x256xf32>
    %13 = arith.negf %11 : vector<128x256xf32>
    %14 = math.exp %13 : vector<128x256xf32>
    %cst_13 = arith.constant 1.000000e+00 : f32
    %15 = vector.broadcast %cst_13 : f32 to vector<128x256xf32>
    %16 = arith.addf %15, %14 : vector<128x256xf32>
    %17 = arith.divf %15, %16 : vector<128x256xf32>
    %18 = arith.mulf %11, %17 : vector<128x256xf32>
    %19 = arith.mulf %18, %12 : vector<128x256xf32>
    %c0_14 = arith.constant 0 : index
    %c0_15 = arith.constant 0 : index
    %20 = vector.load %arg8[%c0_14, %c0_15] : memref<128x128xf32, #tpu.memory_space<vmem>>, vector<128x128xf32>
    %cst_16 = arith.constant dense<0.000000e+00> : vector<128x128xf32>
    %21 = tpu.matmul %19, %10, %cst_16 {dimension_numbers = #tpu.dot_dimension_numbers<[1], [0], [0], [1], [0, 0, 1, 1], [], []>} : vector<128x256xf32>, vector<256x128xf32>, vector<128x128xf32> -> vector<128x128xf32>
    %22 = arith.addf %20, %21 : vector<128x128xf32>
    %c0_17 = arith.constant 0 : index
    %c0_18 = arith.constant 0 : index
    %23 = vector.load %arg8[%c0_17, %c0_18] : memref<128x128xf32, #tpu.memory_space<vmem>>, vector<128x128xf32>
    tpu.vector_store %arg8[%c0_17, %c0_18], %22 {strides = array<i32>} : memref<128x128xf32, #tpu.memory_space<vmem>>, vector<128x128xf32>,
    %c0_i32_19 = arith.constant 0 : i32
    %24 = arith.cmpi eq, %arg2, %c0_i32_19 : i32
    %25 = arith.extui %24 : i1 to i32
    %c0_i32_20 = arith.constant 0 : i32
    %26 = arith.cmpi ne, %25, %c0_i32_20 : i32
    scf.if %26 {
      %c0_21 = arith.constant 0 : index
      %c0_22 = arith.constant 0 : index
      %27 = vector.load %arg8[%c0_21, %c0_22] : memref<128x128xf32, #tpu.memory_space<vmem>>, vector<128x128xf32>
      %c0_23 = arith.constant 0 : index
      %c0_24 = arith.constant 0 : index
      %c0_25 = arith.constant 0 : index
      %28 = vector.load %arg7[%c0_23, %c0_24, %c0_25] : memref<1x128x128xf32, #tpu.memory_space<vmem>>, vector<1x128x128xf32>
      %29 = vector.shape_cast %28 : vector<1x128x128xf32> to vector<128x128xf32>
      %30 = vector.shape_cast %27 : vector<128x128xf32> to vector<1x128x128xf32>
      tpu.vector_store %arg7[%c0_23, %c0_24, %c0_25], %30 {strides = array<i32>} : memref<1x128x128xf32, #tpu.memory_space<vmem>>, vector<1x128x128xf32>,
    } else {
    }
    return
  }
  func.func @transform_0(%arg0: i32, %arg1: i32, %arg2: i32) -> (i32, i32, i32) {
    %c0_i32 = arith.constant 0 : i32
    %c0_i32_0 = arith.constant 0 : i32
    return %arg0, %arg1, %c0_i32 : i32, i32, i32
  }
  func.func @transform_1(%arg0: i32, %arg1: i32, %arg2: i32) -> (i32, i32, i32) {
    %c0_i32 = arith.constant 0 : i32
    %c0_i32_0 = arith.constant 0 : i32
    return %arg0, %c0_i32, %arg2 : i32, i32, i32
  }
  func.func @transform_2(%arg0: i32, %arg1: i32, %arg2: i32) -> (i32, i32, i32) {
    %c0_i32 = arith.constant 0 : i32
    %c0_i32_0 = arith.constant 0 : i32
    return %arg0, %arg2, %c0_i32 : i32, i32, i32
  }
  func.func @transform_3(%arg0: i32, %arg1: i32, %arg2: i32) -> (i32, i32, i32) {
    %c0_i32 = arith.constant 0 : i32
    %c0_i32_0 = arith.constant 0 : i32
    return %arg0, %c0_i32, %arg2 : i32, i32, i32
  }
  func.func @transform_4(%arg0: i32, %arg1: i32, %arg2: i32) -> (i32, i32, i32) {
    %c0_i32 = arith.constant 0 : i32
    %c0_i32_0 = arith.constant 0 : i32
    return %arg0, %arg1, %c0_i32 : i32, i32, i32
  }
}

</mosaic_0001>

<llo_original>
// kernel: tpu_custom_call.1
$region0: #{tpu_custom_call.1}
  #allocation0 [shape = 'u32[]', space=smem, size = 0x4, offset = 0x4, fixed_abs, tag = 'smem constant byte address 0x4 - core index']
  #allocation1 [shape = 'u32[144,128]{1,0:T(1,128)}', space=vmem, size = 0x12000, scoped, tag = 'internal scratch']
  #allocation2 [shape = 'f32[128,128]{1,0:T(8,128)}', space=vmem, size = 0x10000, scoped, tag = 'scratch operand']
  %s0 = inlined_call_operand.hbm [shape: f32[2,128,128], index: 0, kind: input, shape index: {}]
  %s1 = inlined_call_operand.hbm [shape: f32[2,128,256], index: 1, kind: input, shape index: {}]
  %s2 = inlined_call_operand.hbm [shape: f32[2,256,128], index: 2, kind: input, shape index: {}]
  %s3 = inlined_call_operand.hbm [shape: f32[2,128,256], index: 3, kind: input, shape index: {}]
  %s4 = inlined_call_operand.hbm [shape: f32[2,128,128], index: 4, kind: output, shape index: {}]
  %s5 = sld [smem:[#allocation0]]
  $region73: #{tpu_custom_call.1} parent=0
    _
  %s7 = ssub.s32 1, %s5
  %s8 = scalar_select 0, %s7, %s5
  $region1: #{tpu_custom_call.1} parent=0
    #allocation3 [shape = 'u8[131072]{0}', space=vmem, size = 0x20000, scoped, tag = 'input window, operand 0']
    #allocation4 [shape = 's32[2]{0}', space=sflag, size = 0x8, scoped, tag = 'scoped memory for tpu_custom_call.1']
    #allocation5 [shape = 's32[2]{0}', space=sflag, size = 0x8, scoped, tag = 'scoped memory for tpu_custom_call.1']
    #allocation6 [shape = 'u8[262144]{0}', space=vmem, size = 0x40000, scoped, tag = 'input window, operand 1']
    #allocation7 [shape = 's32[2]{0}', space=sflag, size = 0x8, scoped, tag = 'scoped memory for tpu_custom_call.1']
    #allocation8 [shape = 'u8[262144]{0}', space=vmem, size = 0x40000, scoped, tag = 'input window, operand 2']
    #allocation9 [shape = 'u8[262144]{0}', space=vmem, size = 0x40000, scoped, tag = 'input window, operand 3']
    #allocation10 [shape = 's32[2]{0}', space=sflag, size = 0x8, scoped, tag = 'scoped memory for tpu_custom_call.1']
    #allocation11 [shape = 'u8[131072]{0}', space=vmem, size = 0x20000, scoped, tag = 'output window, operand 0']
    %9 = vsyncpa [#allocation4], 0
    %s10 = scalar_lea.sflag [#allocation4], 1
    %11 = vsyncpa %s10, 0
    %12 = vsyncpa [#allocation7], 0
    %s13 = scalar_lea.sflag [#allocation7], 1
    %14 = vsyncpa %s13, 0
    %15 = vsyncpa [#allocation10], 0
    %s16 = scalar_lea.sflag [#allocation10], 1
    %17 = vsyncpa %s16, 0
    %18 = vsyncpa [#allocation5], 0
    %s19 = scalar_lea.sflag [#allocation5], 1
    %20 = vsyncpa %s19, 0
    loop: start=0, step=1, limit=4
    $region2: #{tpu_custom_call.1} parent=1 // loop_pre_header
      _
    $region3: #{tpu_custom_call.1} parent=1 // loop_header
      %s22 = sphi 0, %s26
      %p23 = scmp.ge.s32.totalorder %s22, 4
      %s29 = sphi 0, %s48
      %s30 = sphi 0, %s44
      %s31 = sphi 0, %s40
      %s32 = sphi 0, %s29
      %s33 = sphi 0, %s30
      %s34 = sphi 0, %s31
      %s35 = sphi 0, %s32
      %s36 = sphi 0, %s33
      %s37 = sphi 0, %s34
      %s53 = sphi 0, %s55
      %s56 = sphi 0, %s53
      %s57 = sphi 0, %s56
      %s73 = sphi 0, %s57
      %s81 = sphi 0, %s83
      %s84 = sphi 0, %s81
      %s85 = sphi 0, %s84
      %s101 = sphi 0, %s85
      %s109 = sphi 0, %s111
      %s112 = sphi 0, %s109
      %s113 = sphi 0, %s112
      %s129 = sphi 0, %s113
      %s137 = sphi 0, %s139
      %s140 = sphi 0, %s137
      %s141 = sphi 0, %s140
      %s157 = sphi 0, %s141
      %s165 = sphi 0, %s167
      %s168 = sphi 0, %s165
      %s169 = sphi 0, %s168
      %s185 = sphi 0, %s169
    $region4: #{tpu_custom_call.1} parent=1 // loop_header_branch
      %25 = sbr.rel (%p23) target = $region8
    $region5: #{tpu_custom_call.1} parent=1 // loop_body
      %s27 = ssub.s32 %s22, 1
      %s28 = ssub.s32 %s22, 2
      %s38 = sadd.s32 1, %s31
      %p39 = scmp.ge.s32.totalorder %s38, 1
      %s40 = scalar_select %p39, 0, %s38
      %s41 = sadd.s32 1, %s30
      %s42 = scalar_select %p39, %s41, %s30
      %p43 = scmp.ge.s32.totalorder %s42, 1
      %s44 = scalar_select %p43, 0, %s42
      %s45 = sadd.s32 1, %s29
      %s46 = scalar_select %p43, %s45, %s29
      %p47 = scmp.ge.s32.totalorder %s46, 2
      %s48 = scalar_select %p47, 0, %s46
      %s49 = ssub.s32 %s29, %s48
      %s50 = ssub.s32 %s30, %s44
      %s51 = sor.u32 %s49, %s50
      %p52 = scmp.eq.s32.totalorder %s51, 0
      %s54 = sadd.s32 %s53, 1
      %s55 = scalar_select %p52, %s53, %s54
      %p58 = pneg %p52
      %p59 = scmp.eq.s32.totalorder %s22, 1
      %p60 = por %p58, %p59
      %p61 = scmp.ne.s32.totalorder %s53, %s56
      %p62 = scmp.eq.s32.totalorder %s22, 0
      %p63 = por %p61, %p62
      %p64 = scmp.ne.s32.totalorder %s53, %s56
      %p65 = scmp.eq.s32.totalorder %s27, 1
      %p66 = por %p64, %p65
      %p67 = scmp.ne.s32.totalorder %s56, %s57
      %p68 = scmp.eq.s32.totalorder %s27, 0
      %p69 = por %p67, %p68
      %p70 = scmp.ne.s32.totalorder %s56, %s57
      %p71 = scmp.eq.s32.totalorder %s28, 1
      %p72 = por %p70, %p71
      %p74 = scmp.ne.s32.totalorder %s57, %s73
      %p75 = scmp.eq.s32.totalorder %s28, 0
      %p76 = por %p74, %p75
      %s77 = ssub.s32 %s29, %s48
      %s78 = ssub.s32 %s31, %s40
      %s79 = sor.u32 %s77, %s78
      %p80 = scmp.eq.s32.totalorder %s79, 0
      %s82 = sadd.s32 %s81, 1
      %s83 = scalar_select %p80, %s81, %s82
      %p86 = pneg %p80
      %p87 = scmp.eq.s32.totalorder %s22, 1
      %p88 = por %p86, %p87
      %p89 = scmp.ne.s32.totalorder %s81, %s84
      %p90 = scmp.eq.s32.totalorder %s22, 0
      %p91 = por %p89, %p90
      %p92 = scmp.ne.s32.totalorder %s81, %s84
      %p93 = scmp.eq.s32.totalorder %s27, 1
      %p94 = por %p92, %p93
      %p95 = scmp.ne.s32.totalorder %s84, %s85
      %p96 = scmp.eq.s32.totalorder %s27, 0
      %p97 = por %p95, %p96
      %p98 = scmp.ne.s32.totalorder %s84, %s85
      %p99 = scmp.eq.s32.totalorder %s28, 1
      %p100 = por %p98, %p99
      %p102 = scmp.ne.s32.totalorder %s85, %s101
      %p103 = scmp.eq.s32.totalorder %s28, 0
      %p104 = por %p102, %p103
      %s105 = ssub.s32 %s29, %s48
      %s106 = ssub.s32 %s31, %s40
      %s107 = sor.u32 %s105, %s106
      %p108 = scmp.eq.s32.totalorder %s107, 0
      %s110 = sadd.s32 %s109, 1
      %s111 = scalar_select %p108, %s109, %s110
      %p114 = pneg %p108
      %p115 = scmp.eq.s32.totalorder %s22, 1
      %p116 = por %p114, %p115
      %p117 = scmp.ne.s32.totalorder %s109, %s112
      %p118 = scmp.eq.s32.totalorder %s22, 0
      %p119 = por %p117, %p118
      %p120 = scmp.ne.s32.totalorder %s109, %s112
      %p121 = scmp.eq.s32.totalorder %s27, 1
      %p122 = por %p120, %p121
      %p123 = scmp.ne.s32.totalorder %s112, %s113
      %p124 = scmp.eq.s32.totalorder %s27, 0
      %p125 = por %p123, %p124
      %p126 = scmp.ne.s32.totalorder %s112, %s113
      %p127 = scmp.eq.s32.totalorder %s28, 1
      %p128 = por %p126, %p127
      %p130 = scmp.ne.s32.totalorder %s113, %s129
      %p131 = scmp.eq.s32.totalorder %s28, 0
      %p132 = por %p130, %p131
      %s133 = ssub.s32 %s29, %s48
      %s134 = ssub.s32 %s31, %s40
      %s135 = sor.u32 %s133, %s134
      %p136 = scmp.eq.s32.totalorder %s135, 0
      %s138 = sadd.s32 %s137, 1
      %s139 = scalar_select %p136, %s137, %s138
      %p142 = pneg %p136
      %p143 = scmp.eq.s32.totalorder %s22, 1
      %p144 = por %p142, %p143
      %p145 = scmp.ne.s32.totalorder %s137, %s140
      %p146 = scmp.eq.s32.totalorder %s22, 0
      %p147 = por %p145, %p146
      %p148 = scmp.ne.s32.totalorder %s137, %s140
      %p149 = scmp.eq.s32.totalorder %s27, 1
      %p150 = por %p148, %p149
      %p151 = scmp.ne.s32.totalorder %s140, %s141
      %p152 = scmp.eq.s32.totalorder %s27, 0
      %p153 = por %p151, %p152
      %p154 = scmp.ne.s32.totalorder %s140, %s141
      %p155 = scmp.eq.s32.totalorder %s28, 1
      %p156 = por %p154, %p155
      %p158 = scmp.ne.s32.totalorder %s141, %s157
      %p159 = scmp.eq.s32.totalorder %s28, 0
      %p160 = por %p158, %p159
      %s161 = ssub.s32 %s29, %s48
      %s162 = ssub.s32 %s30, %s44
      %s163 = sor.u32 %s161, %s162
      %p164 = scmp.eq.s32.totalorder %s163, 0
      %s166 = sadd.s32 %s165, 1
      %s167 = scalar_select %p164, %s165, %s166
      %p170 = pneg %p164
      %p171 = scmp.eq.s32.totalorder %s22, 1
      %p172 = por %p170, %p171
      %p173 = scmp.ne.s32.totalorder %s165, %s168
      %p174 = scmp.eq.s32.totalorder %s22, 0
      %p175 = por %p173, %p174
      %p176 = scmp.ne.s32.totalorder %s165, %s168
      %p177 = scmp.eq.s32.totalorder %s27, 1
      %p178 = por %p176, %p177
      %p179 = scmp.ne.s32.totalorder %s168, %s169
      %p180 = scmp.eq.s32.totalorder %s27, 0
      %p181 = por %p179, %p180
      %p182 = scmp.ne.s32.totalorder %s168, %s169
      %p183 = scmp.eq.s32.totalorder %s28, 1
      %p184 = por %p182, %p183
      %p186 = scmp.ne.s32.totalorder %s169, %s185
      %p187 = scmp.eq.s32.totalorder %s28, 0
      %p188 = por %p186, %p187
      %p189 = scmp.le.s32.totalorder 1, %s22
      %p190 = scmp.lt.s32.totalorder %s22, 3
      %p191 = pnand %p189, %p190
      %p192 = pneg %p191
      // Predicated region
      $region9: #{tpu_custom_call.1} parent=5 // pred_check
        _
      $region10: #{tpu_custom_call.1} parent=5 // pred_check_branch
        %194 = sbr.rel (%p191) target = $region12
      $region11: #{tpu_custom_call.1} parent=5 // pred_region
        %s195 = ssub.s32 %s22, 1
      $region12: #{tpu_custom_call.1} parent=5 // pred_fallthru
        _
      %p196 = scmp.lt.s32.totalorder %s22, 2
      // Predicated region
      $region13: #{tpu_custom_call.1} parent=5 // pred_check
        %p197 = pneg %p196
      $region14: #{tpu_custom_call.1} parent=5 // pred_check_branch
        %199 = sbr.rel (%p197) target = $region16
      $region15: #{tpu_custom_call.1} parent=5 // pred_region
        // Predicated region
        $region17: #{tpu_custom_call.1} parent=15 // pred_check
          %p200 = pneg %p63
        $region18: #{tpu_custom_call.1} parent=15 // pred_check_branch
          %202 = sbr.rel (%p200) target = $region20
        $region19: #{tpu_custom_call.1} parent=15 // pred_region
          %s203 = sand.u32 %s53, 1
          %s204 = scalar_lea.sflag [#allocation4], %s203
          %s205 = sand.u32 %s53, 1
          %s206 = smul.addr %s205, 128
          %s207 = scalar_lea.vmem [#allocation3], %s206
          %s208 = smul.u32 16, %s30
          %s210 = ssub.s32 2048, 2048
          %211 = vsyncadd %s204, %s210
          %s212 = smul.addr %s29, 16
          %s213 = sadd.s32 %s208, %s212
          %s214 = smul.addr %s213, 128
          %s215 = scalar_lea.hbm %s0, %s214
          %s216 = sshll.u32 %s207, 4
          %s217 = int_to_ptr.vmem [resolvable:$true] %s216
          %222 = dma.hbm_to_vmem [thread:$0]  %s215, 2048, %s217, %s204, 128, 128, 8
        $region20: #{tpu_custom_call.1} parent=15 // pred_fallthru
          _
        // Predicated region
        $region21: #{tpu_custom_call.1} parent=15 // pred_check
          %p223 = pneg %p91
        $region22: #{tpu_custom_call.1} parent=15 // pred_check_branch
          %225 = sbr.rel (%p223) target = $region24
        $region23: #{tpu_custom_call.1} parent=15 // pred_region
          %s226 = sand.u32 %s22, 1
          %s227 = scalar_lea.sflag [#allocation7], %s226
          %s228 = sand.u32 %s81, 1
          %s229 = smul.addr %s228, 256
          %s230 = scalar_lea.vmem [#allocation6], %s229
          %s231 = smul.u32 2, %s31
          %s233 = ssub.s32 4096, 4096
          %234 = vsyncadd %s227, %s233
          %s235 = smul.addr %s29, 32
          %s236 = sadd.s32 %s231, %s235
          %s237 = smul.addr %s236, 128
          %s238 = scalar_lea.hbm %s1, %s237
          %s239 = sshll.u32 %s230, 4
          %s240 = int_to_ptr.vmem [resolvable:$true] %s239
          %245 = dma.hbm_to_vmem [thread:$0]  %s238, 4096, %s240, %s227, 256, 256, 16
        $region24: #{tpu_custom_call.1} parent=15 // pred_fallthru
          _
        // Predicated region
        $region25: #{tpu_custom_call.1} parent=15 // pred_check
          %p246 = pneg %p119
        $region26: #{tpu_custom_call.1} parent=15 // pred_check_branch
          %248 = sbr.rel (%p246) target = $region28
        $region27: #{tpu_custom_call.1} parent=15 // pred_region
          %s249 = sand.u32 %s22, 1
          %s250 = scalar_lea.sflag [#allocation7], %s249
          %s251 = sand.u32 %s109, 1
          %s252 = smul.addr %s251, 256
          %s253 = scalar_lea.vmem [#allocation8], %s252
          %s254 = smul.u32 32, %s31
          %s256 = ssub.s32 4096, 4096
          %257 = vsyncadd %s250, %s256
          %s258 = smul.addr %s29, 32
          %s259 = sadd.s32 %s254, %s258
          %s260 = smul.addr %s259, 128
          %s261 = scalar_lea.hbm %s2, %s260
          %s262 = sshll.u32 %s253, 4
          %s263 = int_to_ptr.vmem [resolvable:$true] %s262
          %268 = dma.hbm_to_vmem [thread:$0]  %s261, 4096, %s263, %s250, 128, 128, 8
        $region28: #{tpu_custom_call.1} parent=15 // pred_fallthru
          _
        // Predicated region
        $region29: #{tpu_custom_call.1} parent=15 // pred_check
          %p269 = pneg %p147
        $region30: #{tpu_custom_call.1} parent=15 // pred_check_branch
          %271 = sbr.rel (%p269) target = $region32
        $region31: #{tpu_custom_call.1} parent=15 // pred_region
          %s272 = sand.u32 %s137, 1
          %s273 = scalar_lea.sflag [#allocation10], %s272
          %s274 = sand.u32 %s137, 1
          %s275 = smul.addr %s274, 256
          %s276 = scalar_lea.vmem [#allocation9], %s275
          %s277 = smul.u32 2, %s31
          %s279 = ssub.s32 4096, 4096
          %280 = vsyncadd %s273, %s279
          %s281 = smul.addr %s29, 32
          %s282 = sadd.s32 %s277, %s281
          %s283 = smul.addr %s282, 128
          %s284 = scalar_lea.hbm %s3, %s283
          %s285 = sshll.u32 %s276, 4
          %s286 = int_to_ptr.vmem [resolvable:$true] %s285
          %291 = dma.hbm_to_vmem [thread:$0]  %s284, 4096, %s286, %s273, 256, 256, 16
        $region32: #{tpu_custom_call.1} parent=15 // pred_fallthru
          _
      $region16: #{tpu_custom_call.1} parent=5 // pred_fallthru
        _
      %p292 = scmp.le.s32.totalorder 1, %s22
      %p293 = scmp.lt.s32.totalorder %s22, 3
      %p294 = pnand %p292, %p293
      %p295 = pneg %p294
      // Predicated region
      $region33: #{tpu_custom_call.1} parent=5 // pred_check
        _
      $region34: #{tpu_custom_call.1} parent=5 // pred_check_branch
        %297 = sbr.rel (%p294) target = $region36
      $region35: #{tpu_custom_call.1} parent=5 // pred_region
        %s298 = ssub.s32 %s22, 1
        %s299 = sand.u32 %s56, 1
        %s300 = scalar_lea.sflag [#allocation4], %s299
        %s301 = sand.u32 %s56, 1
        %s302 = smul.addr %s301, 128
        %s303 = scalar_lea.vmem [#allocation3], %s302
        // Predicated region
        $region37: #{tpu_custom_call.1} parent=35 // pred_check
          %p304 = pneg %p69
        $region38: #{tpu_custom_call.1} parent=35 // pred_check_branch
          %306 = sbr.rel (%p304) target = $region40
        $region39: #{tpu_custom_call.1} parent=35 // pred_region
          %307 = dma.done %s300, 2048
        $region40: #{tpu_custom_call.1} parent=35 // pred_fallthru
          _
        %s308 = sand.u32 %s27, 1
        %s309 = scalar_lea.sflag [#allocation7], %s308
        %s310 = sand.u32 %s84, 1
        %s311 = smul.addr %s310, 256
        %s312 = scalar_lea.vmem [#allocation6], %s311
        // Predicated region
        $region41: #{tpu_custom_call.1} parent=35 // pred_check
          %p313 = pneg %p97
        $region42: #{tpu_custom_call.1} parent=35 // pred_check_branch
          %315 = sbr.rel (%p313) target = $region44
        $region43: #{tpu_custom_call.1} parent=35 // pred_region
          %316 = dma.done %s309, 4096
        $region44: #{tpu_custom_call.1} parent=35 // pred_fallthru
          _
        %s317 = sand.u32 %s27, 1
        %s318 = scalar_lea.sflag [#allocation7], %s317
        %s319 = sand.u32 %s112, 1
        %s320 = smul.addr %s319, 256
        %s321 = scalar_lea.vmem [#allocation8], %s320
        // Predicated region
        $region45: #{tpu_custom_call.1} parent=35 // pred_check
          %p322 = pneg %p125
        $region46: #{tpu_custom_call.1} parent=35 // pred_check_branch
          %324 = sbr.rel (%p322) target = $region48
        $region47: #{tpu_custom_call.1} parent=35 // pred_region
          %325 = dma.done %s318, 4096
        $region48: #{tpu_custom_call.1} parent=35 // pred_fallthru
          _
        %s326 = sand.u32 %s140, 1
        %s327 = scalar_lea.sflag [#allocation10], %s326
        %s328 = sand.u32 %s140, 1
        %s329 = smul.addr %s328, 256
        %s330 = scalar_lea.vmem [#allocation9], %s329
        // Predicated region
        $region49: #{tpu_custom_call.1} parent=35 // pred_check
          %p331 = pneg %p153
        $region50: #{tpu_custom_call.1} parent=35 // pred_check_branch
          %333 = sbr.rel (%p331) target = $region52
        $region51: #{tpu_custom_call.1} parent=35 // pred_region
          %334 = dma.done %s327, 4096
        $region52: #{tpu_custom_call.1} parent=35 // pred_fallthru
          _
        %s335 = sand.u32 %s56, 1
        %s336 = scalar_lea.sflag [#allocation4], %s335
        %s337 = sand.u32 %s56, 1
        %s338 = smul.addr %s337, 128
        %s339 = scalar_lea.vmem [#allocation3], %s338
        %p340 = pneg %p69
        %p341 = pneg %p66
        %s342 = sand.u32 %s27, 1
        %s343 = scalar_lea.sflag [#allocation7], %s342
        %s344 = sand.u32 %s84, 1
        %s345 = smul.addr %s344, 256
        %s346 = scalar_lea.vmem [#allocation6], %s345
        %p347 = pneg %p97
        %p348 = pneg %p94
        %s349 = sand.u32 %s27, 1
        %s350 = scalar_lea.sflag [#allocation7], %s349
        %s351 = sand.u32 %s112, 1
        %s352 = smul.addr %s351, 256
        %s353 = scalar_lea.vmem [#allocation8], %s352
        %p354 = pneg %p125
        %p355 = pneg %p122
        %s356 = sand.u32 %s140, 1
        %s357 = scalar_lea.sflag [#allocation10], %s356
        %s358 = sand.u32 %s140, 1
        %s359 = smul.addr %s358, 256
        %s360 = scalar_lea.vmem [#allocation9], %s359
        %p361 = pneg %p153
        %p362 = pneg %p150
        %p363 = pneg %p181
        %p364 = pneg %p178
        %s365 = sand.u32 %s168, 1
        %s366 = scalar_lea.sflag [#allocation5], %s365
        %s367 = sand.u32 %s168, 1
        %s368 = smul.addr %s367, 128
        %s369 = scalar_lea.vmem [#allocation11], %s368
        %s370 = smul.u32 16, %s33
        %s371 = smul.u32 2, %s34
        %s372 = smul.u32 32, %s34
        %s373 = smul.u32 2, %s34
        %s374 = smul.u32 16, %s33
        %p375 = scmp.eq.s32.totalorder %s34, 0
        // Predicated region
        $region53: #{tpu_custom_call.1} parent=35 // pred_check
          %p376 = pneg %p375
        $region54: #{tpu_custom_call.1} parent=35 // pred_check_branch
          %378 = sbr.rel (%p376) target = $region56
        $region55: #{tpu_custom_call.1} parent=35 // pred_region
          %379 = vst [vmem:[#allocation2] sm:$0xff] 0.0
          %380 = vst [vmem:[#allocation2 + $0x8] sm:$0xff] 0.0
          %381 = vst [vmem:[#allocation2 + $0x10] sm:$0xff] 0.0
          %382 = vst [vmem:[#allocation2 + $0x18] sm:$0xff] 0.0
          %383 = vst [vmem:[#allocation2 + $0x20] sm:$0xff] 0.0
          %384 = vst [vmem:[#allocation2 + $0x28] sm:$0xff] 0.0
          %385 = vst [vmem:[#allocation2 + $0x30] sm:$0xff] 0.0
          %386 = vst [vmem:[#allocation2 + $0x38] sm:$0xff] 0.0
          %387 = vst [vmem:[#allocation2 + $0x40] sm:$0xff] 0.0
          %388 = vst [vmem:[#allocation2 + $0x48] sm:$0xff] 0.0
          %389 = vst [vmem:[#allocation2 + $0x50] sm:$0xff] 0.0
          %390 = vst [vmem:[#allocation2 + $0x58] sm:$0xff] 0.0
          %391 = vst [vmem:[#allocation2 + $0x60] sm:$0xff] 0.0
          %392 = vst [vmem:[#allocation2 + $0x68] sm:$0xff] 0.0
          %393 = vst [vmem:[#allocation2 + $0x70] sm:$0xff] 0.0
          %394 = vst [vmem:[#allocation2 + $0x78] sm:$0xff] 0.0
        $region56: #{tpu_custom_call.1} parent=35 // pred_fallthru
          _
        %v395 = vld [vmem:[%s303] sm:$0xff]
        %v396 = vld [vmem:[%s303 + $0x8] sm:$0xff]
        %v397 = vld [vmem:[%s303 + $0x10] sm:$0xff]
        %v398 = vld [vmem:[%s303 + $0x18] sm:$0xff]
        %v399 = vld [vmem:[%s303 + $0x20] sm:$0xff]
        %v400 = vld [vmem:[%s303 + $0x28] sm:$0xff]
        %v401 = vld [vmem:[%s303 + $0x30] sm:$0xff]
        %v402 = vld [vmem:[%s303 + $0x38] sm:$0xff]
        %v403 = vld [vmem:[%s303 + $0x40] sm:$0xff]
        %v404 = vld [vmem:[%s303 + $0x48] sm:$0xff]
        %v405 = vld [vmem:[%s303 + $0x50] sm:$0xff]
        %v406 = vld [vmem:[%s303 + $0x58] sm:$0xff]
        %v407 = vld [vmem:[%s303 + $0x60] sm:$0xff]
        %v408 = vld [vmem:[%s303 + $0x68] sm:$0xff]
        %v409 = vld [vmem:[%s303 + $0x70] sm:$0xff]
        %v410 = vld [vmem:[%s303 + $0x78] sm:$0xff]
        %v411 = vld [vmem:[%s312] sm:$0xff]
        %v412 = vld [vmem:[%s312 + $0x8] sm:$0xff]
        %v413 = vld [vmem:[%s312 + $0x10] sm:$0xff]
        %v414 = vld [vmem:[%s312 + $0x18] sm:$0xff]
        %v415 = vld [vmem:[%s312 + $0x20] sm:$0xff]
        %v416 = vld [vmem:[%s312 + $0x28] sm:$0xff]
        %v417 = vld [vmem:[%s312 + $0x30] sm:$0xff]
        %v418 = vld [vmem:[%s312 + $0x38] sm:$0xff]
        %v419 = vld [vmem:[%s312 + $0x40] sm:$0xff]
        %v420 = vld [vmem:[%s312 + $0x48] sm:$0xff]
        %v421 = vld [vmem:[%s312 + $0x50] sm:$0xff]
        %v422 = vld [vmem:[%s312 + $0x58] sm:$0xff]
        %v423 = vld [vmem:[%s312 + $0x60] sm:$0xff]
        %v424 = vld [vmem:[%s312 + $0x68] sm:$0xff]
        %v425 = vld [vmem:[%s312 + $0x70] sm:$0xff]
        %v426 = vld [vmem:[%s312 + $0x78] sm:$0xff]
        %v427 = vld [vmem:[%s312 + $0x80] sm:$0xff]
        %v428 = vld [vmem:[%s312 + $0x88] sm:$0xff]
        %v429 = vld [vmem:[%s312 + $0x90] sm:$0xff]
        %v430 = vld [vmem:[%s312 + $0x98] sm:$0xff]
        %v431 = vld [vmem:[%s312 + $0xa0] sm:$0xff]
        %v432 = vld [vmem:[%s312 + $0xa8] sm:$0xff]
        %v433 = vld [vmem:[%s312 + $0xb0] sm:$0xff]
        %v434 = vld [vmem:[%s312 + $0xb8] sm:$0xff]
        %v435 = vld [vmem:[%s312 + $0xc0] sm:$0xff]
        %v436 = vld [vmem:[%s312 + $0xc8] sm:$0xff]
        %v437 = vld [vmem:[%s312 + $0xd0] sm:$0xff]
        %v438 = vld [vmem:[%s312 + $0xd8] sm:$0xff]
        %v439 = vld [vmem:[%s312 + $0xe0] sm:$0xff]
        %v440 = vld [vmem:[%s312 + $0xe8] sm:$0xff]
        %v441 = vld [vmem:[%s312 + $0xf0] sm:$0xff]
        %v442 = vld [vmem:[%s312 + $0xf8] sm:$0xff]
        %v443 = vld [vmem:[%s330] sm:$0xff]
        %v444 = vld [vmem:[%s330 + $0x8] sm:$0xff]
        %v445 = vld [vmem:[%s330 + $0x10] sm:$0xff]
        %v446 = vld [vmem:[%s330 + $0x18] sm:$0xff]
        %v447 = vld [vmem:[%s330 + $0x20] sm:$0xff]
        %v448 = vld [vmem:[%s330 + $0x28] sm:$0xff]
        %v449 = vld [vmem:[%s330 + $0x30] sm:$0xff]
        %v450 = vld [vmem:[%s330 + $0x38] sm:$0xff]
        %v451 = vld [vmem:[%s330 + $0x40] sm:$0xff]
        %v452 = vld [vmem:[%s330 + $0x48] sm:$0xff]
        %v453 = vld [vmem:[%s330 + $0x50] sm:$0xff]
        %v454 = vld [vmem:[%s330 + $0x58] sm:$0xff]
        %v455 = vld [vmem:[%s330 + $0x60] sm:$0xff]
        %v456 = vld [vmem:[%s330 + $0x68] sm:$0xff]
        %v457 = vld [vmem:[%s330 + $0x70] sm:$0xff]
        %v458 = vld [vmem:[%s330 + $0x78] sm:$0xff]
        %v459 = vld [vmem:[%s330 + $0x80] sm:$0xff]
        %v460 = vld [vmem:[%s330 + $0x88] sm:$0xff]
        %v461 = vld [vmem:[%s330 + $0x90] sm:$0xff]
        %v462 = vld [vmem:[%s330 + $0x98] sm:$0xff]
        %v463 = vld [vmem:[%s330 + $0xa0] sm:$0xff]
        %v464 = vld [vmem:[%s330 + $0xa8] sm:$0xff]
        %v465 = vld [vmem:[%s330 + $0xb0] sm:$0xff]
        %v466 = vld [vmem:[%s330 + $0xb8] sm:$0xff]
        %v467 = vld [vmem:[%s330 + $0xc0] sm:$0xff]
        %v468 = vld [vmem:[%s330 + $0xc8] sm:$0xff]
        %v469 = vld [vmem:[%s330 + $0xd0] sm:$0xff]
        %v470 = vld [vmem:[%s330 + $0xd8] sm:$0xff]
        %v471 = vld [vmem:[%s330 + $0xe0] sm:$0xff]
        %v472 = vld [vmem:[%s330 + $0xe8] sm:$0xff]
        %v473 = vld [vmem:[%s330 + $0xf0] sm:$0xff]
        %v474 = vld [vmem:[%s330 + $0xf8] sm:$0xff]
        %v475 = vld [vmem:[%s321] sm:$0xff]
        %v476 = vld [vmem:[%s321 + $0x8] sm:$0xff]
        %v477 = vld [vmem:[%s321 + $0x10] sm:$0xff]
        %v478 = vld [vmem:[%s321 + $0x18] sm:$0xff]
        %v479 = vld [vmem:[%s321 + $0x20] sm:$0xff]
        %v480 = vld [vmem:[%s321 + $0x28] sm:$0xff]
        %v481 = vld [vmem:[%s321 + $0x30] sm:$0xff]
        %v482 = vld [vmem:[%s321 + $0x38] sm:$0xff]
        %v483 = vld [vmem:[%s321 + $0x40] sm:$0xff]
        %v484 = vld [vmem:[%s321 + $0x48] sm:$0xff]
        %v485 = vld [vmem:[%s321 + $0x50] sm:$0xff]
        %v486 = vld [vmem:[%s321 + $0x58] sm:$0xff]
        %v487 = vld [vmem:[%s321 + $0x60] sm:$0xff]
        %v488 = vld [vmem:[%s321 + $0x68] sm:$0xff]
        %v489 = vld [vmem:[%s321 + $0x70] sm:$0xff]
        %v490 = vld [vmem:[%s321 + $0x78] sm:$0xff]
        %v491 = vld [vmem:[%s321 + $0x80] sm:$0xff]
        %v492 = vld [vmem:[%s321 + $0x88] sm:$0xff]
        %v493 = vld [vmem:[%s321 + $0x90] sm:$0xff]
        %v494 = vld [vmem:[%s321 + $0x98] sm:$0xff]
        %v495 = vld [vmem:[%s321 + $0xa0] sm:$0xff]
        %v496 = vld [vmem:[%s321 + $0xa8] sm:$0xff]
        %v497 = vld [vmem:[%s321 + $0xb0] sm:$0xff]
        %v498 = vld [vmem:[%s321 + $0xb8] sm:$0xff]
        %v499 = vld [vmem:[%s321 + $0xc0] sm:$0xff]
        %v500 = vld [vmem:[%s321 + $0xc8] sm:$0xff]
        %v501 = vld [vmem:[%s321 + $0xd0] sm:$0xff]
        %v502 = vld [vmem:[%s321 + $0xd8] sm:$0xff]
        %v503 = vld [vmem:[%s321 + $0xe0] sm:$0xff]
        %v504 = vld [vmem:[%s321 + $0xe8] sm:$0xff]
        %v505 = vld [vmem:[%s321 + $0xf0] sm:$0xff]
        %v506 = vld [vmem:[%s321 + $0xf8] sm:$0xff]
        %507 = vmatprep.subr.mxu0 %v412
        %508 = vmatpush1.msra.mxu0 %v411
        %509 = vmatprep.subr.mxu0 %v414
        %510 = vmatpush1.msra.mxu0 %v413
        %511 = vmatprep.subr.mxu0 %v416
        %512 = vmatpush1.msra.mxu0 %v415
        %513 = vmatprep.subr.mxu0 %v418
        %514 = vmatpush1.msra.mxu0 %v417
        %515 = vmatprep.subr.mxu0 %v420
        %516 = vmatpush1.msra.mxu0 %v419
        %517 = vmatprep.subr.mxu0 %v422
        %518 = vmatpush1.msra.mxu0 %v421
        %519 = vmatprep.subr.mxu0 %v424
        %520 = vmatpush1.msra.mxu0 %v423
        %521 = vmatprep.subr.mxu0 %v426
        %522 = vmatpush1.msra.mxu0 %v425
        %523 = vmatprep.subr.mxu0 %v428
        %524 = vmatpush1.msra.mxu0 %v427
        %525 = vmatprep.subr.mxu0 %v430
        %526 = vmatpush1.msra.mxu0 %v429
        %527 = vmatprep.subr.mxu0 %v432
        %528 = vmatpush1.msra.mxu0 %v431
        %529 = vmatprep.subr.mxu0 %v434
        %530 = vmatpush1.msra.mxu0 %v433
        %531 = vmatprep.subr.mxu0 %v436
        %532 = vmatpush1.msra.mxu0 %v435
        %533 = vmatprep.subr.mxu0 %v438
        %534 = vmatpush1.msra.mxu0 %v437
        %535 = vmatprep.subr.mxu0 %v440
        %536 = vmatpush1.msra.mxu0 %v439
        %537 = vmatprep.subr.mxu0 %v442
        %538 = vmatpush1.msra.mxu0 %v441
        %539 = vmatprep.subr.mxu0 0.0
        %540 = vmatpush1.msra.mxu0 0.0
        %541 = vmatprep.subr.mxu0 0.0
        %542 = vmatpush1.msra.mxu0 0.0
        %543 = vmatprep.subr.mxu0 0.0
        %544 = vmatpush1.msra.mxu0 0.0
        %545 = vmatprep.subr.mxu0 0.0
        %546 = vmatpush1.msra.mxu0 0.0
        %547 = vmatprep.subr.mxu0 0.0
        %548 = vmatpush1.msra.mxu0 0.0
        %549 = vmatprep.subr.mxu0 0.0
        %550 = vmatpush1.msra.mxu0 0.0
        %551 = vmatprep.subr.mxu0 0.0
        %552 = vmatpush1.msra.mxu0 0.0
        %553 = vmatprep.subr.mxu0 0.0
        %554 = vmatpush1.msra.mxu0 0.0
        %555 = vmatprep.subr.mxu0 0.0
        %556 = vmatpush1.msra.mxu0 0.0
        %557 = vmatprep.subr.mxu0 0.0
        %558 = vmatpush1.msra.mxu0 0.0
        %559 = vmatprep.subr.mxu0 0.0
        %560 = vmatpush1.msra.mxu0 0.0
        %561 = vmatprep.subr.mxu0 0.0
        %562 = vmatpush1.msra.mxu0 0.0
        %563 = vmatprep.subr.mxu0 0.0
        %564 = vmatpush1.msra.mxu0 0.0
        %565 = vmatprep.subr.mxu0 0.0
        %566 = vmatpush1.msra.mxu0 0.0
        %567 = vmatprep.subr.mxu0 0.0
        %568 = vmatpush1.msra.mxu0 0.0
        %569 = vmatprep.subr.mxu0 0.0
        %570 = vmatpush1.msra.mxu0 0.0
        %571 = vmatprep.mubr.f32.mxu0 0.0
        %572 = vmatmul.mubr.f32.gmra.mrb[0].mxu0 %v395
        %v573 = vpop.f32.mrb[0].mxu0
        %v574 = vadd.f32 0.0, %v573
        %v575 = vpop.f32.mrb[0].mxu0
        %v576 = vadd.f32 0.0, %v575
        %577 = vmatprep.mubr.f32.mxu0 0.0
        %578 = vmatmul.mubr.f32.gmra.mrb[0].mxu0 %v396
        %v579 = vpop.f32.mrb[0].mxu0
        %v580 = vadd.f32 0.0, %v579
        %v581 = vpop.f32.mrb[0].mxu0
        %v582 = vadd.f32 0.0, %v581
        %583 = vmatprep.mubr.f32.mxu0 0.0
        %584 = vmatmul.mubr.f32.gmra.mrb[0].mxu0 %v397
        %v585 = vpop.f32.mrb[0].mxu0
        %v586 = vadd.f32 0.0, %v585
        %v587 = vpop.f32.mrb[0].mxu0
        %v588 = vadd.f32 0.0, %v587
        %589 = vmatprep.mubr.f32.mxu0 0.0
        %590 = vmatmul.mubr.f32.gmra.mrb[0].mxu0 %v398
        %v591 = vpop.f32.mrb[0].mxu0
        %v592 = vadd.f32 0.0, %v591
        %v593 = vpop.f32.mrb[0].mxu0
        %v594 = vadd.f32 0.0, %v593
        %595 = vmatprep.mubr.f32.mxu0 0.0
        %596 = vmatmul.mubr.f32.gmra.mrb[0].mxu0 %v399
        %v597 = vpop.f32.mrb[0].mxu0
        %v598 = vadd.f32 0.0, %v597
        %v599 = vpop.f32.mrb[0].mxu0
        %v600 = vadd.f32 0.0, %v599
        %601 = vmatprep.mubr.f32.mxu0 0.0
        %602 = vmatmul.mubr.f32.gmra.mrb[0].mxu0 %v400
        %v603 = vpop.f32.mrb[0].mxu0
        %v604 = vadd.f32 0.0, %v603
        %v605 = vpop.f32.mrb[0].mxu0
        %v606 = vadd.f32 0.0, %v605
        %607 = vmatprep.mubr.f32.mxu0 0.0
        %608 = vmatmul.mubr.f32.gmra.mrb[0].mxu0 %v401
        %v609 = vpop.f32.mrb[0].mxu0
        %v610 = vadd.f32 0.0, %v609
        %v611 = vpop.f32.mrb[0].mxu0
        %v612 = vadd.f32 0.0, %v611
        %613 = vmatprep.mubr.f32.mxu0 0.0
        %614 = vmatmul.mubr.f32.gmra.mrb[0].mxu0 %v402
        %v615 = vpop.f32.mrb[0].mxu0
        %v616 = vadd.f32 0.0, %v615
        %v617 = vpop.f32.mrb[0].mxu0
        %v618 = vadd.f32 0.0, %v617
        %619 = vmatprep.mubr.f32.mxu0 0.0
        %620 = vmatmul.mubr.f32.gmra.mrb[0].mxu0 %v403
        %v621 = vpop.f32.mrb[0].mxu0
        %v622 = vadd.f32 0.0, %v621
        %v623 = vpop.f32.mrb[0].mxu0
        %v624 = vadd.f32 0.0, %v623
        %625 = vmatprep.mubr.f32.mxu0 0.0
        %626 = vmatmul.mubr.f32.gmra.mrb[0].mxu0 %v404
        %v627 = vpop.f32.mrb[0].mxu0
        %v628 = vadd.f32 0.0, %v627
        %v629 = vpop.f32.mrb[0].mxu0
        %v630 = vadd.f32 0.0, %v629
        %631 = vmatprep.mubr.f32.mxu0 0.0
        %632 = vmatmul.mubr.f32.gmra.mrb[0].mxu0 %v405
        %v633 = vpop.f32.mrb[0].mxu0
        %v634 = vadd.f32 0.0, %v633
        %v635 = vpop.f32.mrb[0].mxu0
        %v636 = vadd.f32 0.0, %v635
        %637 = vmatprep.mubr.f32.mxu0 0.0
        %638 = vmatmul.mubr.f32.gmra.mrb[0].mxu0 %v406
        %v639 = vpop.f32.mrb[0].mxu0
        %v640 = vadd.f32 0.0, %v639
        %v641 = vpop.f32.mrb[0].mxu0
        %v642 = vadd.f32 0.0, %v641
        %643 = vmatprep.mubr.f32.mxu0 0.0
        %644 = vmatmul.mubr.f32.gmra.mrb[0].mxu0 %v407
        %v645 = vpop.f32.mrb[0].mxu0
        %v646 = vadd.f32 0.0, %v645
        %v647 = vpop.f32.mrb[0].mxu0
        %v648 = vadd.f32 0.0, %v647
        %649 = vmatprep.mubr.f32.mxu0 0.0
        %650 = vmatmul.mubr.f32.gmra.mrb[0].mxu0 %v408
        %v651 = vpop.f32.mrb[0].mxu0
        %v652 = vadd.f32 0.0, %v651
        %v653 = vpop.f32.mrb[0].mxu0
        %v654 = vadd.f32 0.0, %v653
        %655 = vmatprep.mubr.f32.mxu0 0.0
        %656 = vmatmul.mubr.f32.gmra.mrb[0].mxu0 %v409
        %v657 = vpop.f32.mrb[0].mxu0
        %v658 = vadd.f32 0.0, %v657
        %v659 = vpop.f32.mrb[0].mxu0
        %v660 = vadd.f32 0.0, %v659
        %661 = vmatprep.mubr.f32.mxu0 0.0
        %662 = vmatmul.mubr.f32.gmra.mrb[0].mxu0 %v410
        %v663 = vpop.f32.mrb[0].mxu0
        %v664 = vadd.f32 0.0, %v663
        %v665 = vpop.f32.mrb[0].mxu0
        %v666 = vadd.f32 0.0, %v665
        %667 = vdwg.mxu0
        %668 = vmatprep.subr.mxu0 %v444
        %669 = vmatpush1.msra.mxu0 %v443
        %670 = vmatprep.subr.mxu0 %v446
        %671 = vmatpush1.msra.mxu0 %v445
        %672 = vmatprep.subr.mxu0 %v448
        %673 = vmatpush1.msra.mxu0 %v447
        %674 = vmatprep.subr.mxu0 %v450
        %675 = vmatpush1.msra.mxu0 %v449
        %676 = vmatprep.subr.mxu0 %v452
        %677 = vmatpush1.msra.mxu0 %v451
        %678 = vmatprep.subr.mxu0 %v454
        %679 = vmatpush1.msra.mxu0 %v453
        %680 = vmatprep.subr.mxu0 %v456
        %681 = vmatpush1.msra.mxu0 %v455
        %682 = vmatprep.subr.mxu0 %v458
        %683 = vmatpush1.msra.mxu0 %v457
        %684 = vmatprep.subr.mxu0 %v460
        %685 = vmatpush1.msra.mxu0 %v459
        %686 = vmatprep.subr.mxu0 %v462
        %687 = vmatpush1.msra.mxu0 %v461
        %688 = vmatprep.subr.mxu0 %v464
        %689 = vmatpush1.msra.mxu0 %v463
        %690 = vmatprep.subr.mxu0 %v466
        %691 = vmatpush1.msra.mxu0 %v465
        %692 = vmatprep.subr.mxu0 %v468
        %693 = vmatpush1.msra.mxu0 %v467
        %694 = vmatprep.subr.mxu0 %v470
        %695 = vmatpush1.msra.mxu0 %v469
        %696 = vmatprep.subr.mxu0 %v472
        %697 = vmatpush1.msra.mxu0 %v471
        %698 = vmatprep.subr.mxu0 %v474
        %699 = vmatpush1.msra.mxu0 %v473
        %700 = vmatprep.subr.mxu0 0.0
        %701 = vmatpush1.msra.mxu0 0.0
        %702 = vmatprep.subr.mxu0 0.0
        %703 = vmatpush1.msra.mxu0 0.0
        %704 = vmatprep.subr.mxu0 0.0
        %705 = vmatpush1.msra.mxu0 0.0
        %706 = vmatprep.subr.mxu0 0.0
        %707 = vmatpush1.msra.mxu0 0.0
        %708 = vmatprep.subr.mxu0 0.0
        %709 = vmatpush1.msra.mxu0 0.0
        %710 = vmatprep.subr.mxu0 0.0
        %711 = vmatpush1.msra.mxu0 0.0
        %712 = vmatprep.subr.mxu0 0.0
        %713 = vmatpush1.msra.mxu0 0.0
        %714 = vmatprep.subr.mxu0 0.0
        %715 = vmatpush1.msra.mxu0 0.0
        %716 = vmatprep.subr.mxu0 0.0
        %717 = vmatpush1.msra.mxu0 0.0
        %718 = vmatprep.subr.mxu0 0.0
        %719 = vmatpush1.msra.mxu0 0.0
        %720 = vmatprep.subr.mxu0 0.0
        %721 = vmatpush1.msra.mxu0 0.0
        %722 = vmatprep.subr.mxu0 0.0
        %723 = vmatpush1.msra.mxu0 0.0
        %724 = vmatprep.subr.mxu0 0.0
        %725 = vmatpush1.msra.mxu0 0.0
        %726 = vmatprep.subr.mxu0 0.0
        %727 = vmatpush1.msra.mxu0 0.0
        %728 = vmatprep.subr.mxu0 0.0
        %729 = vmatpush1.msra.mxu0 0.0
        %730 = vmatprep.subr.mxu0 0.0
        %731 = vmatpush1.msra.mxu0 0.0
        %732 = vmatprep.mubr.f32.mxu0 0.0
        %733 = vmatmul.mubr.f32.gmra.mrb[0].mxu0 %v395
        %v734 = vpop.f32.mrb[0].mxu0
        %v735 = vadd.f32 0.0, %v734
        %v736 = vpop.f32.mrb[0].mxu0
        %v737 = vadd.f32 0.0, %v736
        %738 = vmatprep.mubr.f32.mxu0 0.0
        %739 = vmatmul.mubr.f32.gmra.mrb[0].mxu0 %v396
        %v740 = vpop.f32.mrb[0].mxu0
        %v741 = vadd.f32 0.0, %v740
        %v742 = vpop.f32.mrb[0].mxu0
        %v743 = vadd.f32 0.0, %v742
        %744 = vmatprep.mubr.f32.mxu0 0.0
        %745 = vmatmul.mubr.f32.gmra.mrb[0].mxu0 %v397
        %v746 = vpop.f32.mrb[0].mxu0
        %v747 = vadd.f32 0.0, %v746
        %v748 = vpop.f32.mrb[0].mxu0
        %v749 = vadd.f32 0.0, %v748
        %750 = vmatprep.mubr.f32.mxu0 0.0
        %751 = vmatmul.mubr.f32.gmra.mrb[0].mxu0 %v398
        %v752 = vpop.f32.mrb[0].mxu0
        %v753 = vadd.f32 0.0, %v752
        %v754 = vpop.f32.mrb[0].mxu0
        %v755 = vadd.f32 0.0, %v754
        %756 = vmatprep.mubr.f32.mxu0 0.0
        %757 = vmatmul.mubr.f32.gmra.mrb[0].mxu0 %v399
        %v758 = vpop.f32.mrb[0].mxu0
        %v759 = vadd.f32 0.0, %v758
        %v760 = vpop.f32.mrb[0].mxu0
        %v761 = vadd.f32 0.0, %v760
        %762 = vmatprep.mubr.f32.mxu0 0.0
        %763 = vmatmul.mubr.f32.gmra.mrb[0].mxu0 %v400
        %v764 = vpop.f32.mrb[0].mxu0
        %v765 = vadd.f32 0.0, %v764
        %v766 = vpop.f32.mrb[0].mxu0
        %v767 = vadd.f32 0.0, %v766
        %768 = vmatprep.mubr.f32.mxu0 0.0
        %769 = vmatmul.mubr.f32.gmra.mrb[0].mxu0 %v401
        %v770 = vpop.f32.mrb[0].mxu0
        %v771 = vadd.f32 0.0, %v770
        %v772 = vpop.f32.mrb[0].mxu0
        %v773 = vadd.f32 0.0, %v772
        %774 = vmatprep.mubr.f32.mxu0 0.0
        %775 = vmatmul.mubr.f32.gmra.mrb[0].mxu0 %v402
        %v776 = vpop.f32.mrb[0].mxu0
        %v777 = vadd.f32 0.0, %v776
        %v778 = vpop.f32.mrb[0].mxu0
        %v779 = vadd.f32 0.0, %v778
        %780 = vmatprep.mubr.f32.mxu0 0.0
        %781 = vmatmul.mubr.f32.gmra.mrb[0].mxu0 %v403
        %v782 = vpop.f32.mrb[0].mxu0
        %v783 = vadd.f32 0.0, %v782
        %v784 = vpop.f32.mrb[0].mxu0
        %v785 = vadd.f32 0.0, %v784
        %786 = vmatprep.mubr.f32.mxu0 0.0
        %787 = vmatmul.mubr.f32.gmra.mrb[0].mxu0 %v404
        %v788 = vpop.f32.mrb[0].mxu0
        %v789 = vadd.f32 0.0, %v788
        %v790 = vpop.f32.mrb[0].mxu0
        %v791 = vadd.f32 0.0, %v790
        %792 = vmatprep.mubr.f32.mxu0 0.0
        %793 = vmatmul.mubr.f32.gmra.mrb[0].mxu0 %v405
        %v794 = vpop.f32.mrb[0].mxu0
        %v795 = vadd.f32 0.0, %v794
        %v796 = vpop.f32.mrb[0].mxu0
        %v797 = vadd.f32 0.0, %v796
        %798 = vmatprep.mubr.f32.mxu0 0.0
        %799 = vmatmul.mubr.f32.gmra.mrb[0].mxu0 %v406
        %v800 = vpop.f32.mrb[0].mxu0
        %v801 = vadd.f32 0.0, %v800
        %v802 = vpop.f32.mrb[0].mxu0
        %v803 = vadd.f32 0.0, %v802
        %804 = vmatprep.mubr.f32.mxu0 0.0
        %805 = vmatmul.mubr.f32.gmra.mrb[0].mxu0 %v407
        %v806 = vpop.f32.mrb[0].mxu0
        %v807 = vadd.f32 0.0, %v806
        %v808 = vpop.f32.mrb[0].mxu0
        %v809 = vadd.f32 0.0, %v808
        %810 = vmatprep.mubr.f32.mxu0 0.0
        %811 = vmatmul.mubr.f32.gmra.mrb[0].mxu0 %v408
        %v812 = vpop.f32.mrb[0].mxu0
        %v813 = vadd.f32 0.0, %v812
        %v814 = vpop.f32.mrb[0].mxu0
        %v815 = vadd.f32 0.0, %v814
        %816 = vmatprep.mubr.f32.mxu0 0.0
        %817 = vmatmul.mubr.f32.gmra.mrb[0].mxu0 %v409
        %v818 = vpop.f32.mrb[0].mxu0
        %v819 = vadd.f32 0.0, %v818
        %v820 = vpop.f32.mrb[0].mxu0
        %v821 = vadd.f32 0.0, %v820
        %822 = vmatprep.mubr.f32.mxu0 0.0
        %823 = vmatmul.mubr.f32.gmra.mrb[0].mxu0 %v410
        %v824 = vpop.f32.mrb[0].mxu0
        %v825 = vadd.f32 0.0, %v824
        %v826 = vpop.f32.mrb[0].mxu0
        %v827 = vadd.f32 0.0, %v826
        %828 = vdwg.mxu0
        %v829 = vxor.u32 %v574, 2147483648
        %v830 = vxor.u32 %v576, 2147483648
        %v831 = vxor.u32 %v580, 2147483648
        %v832 = vxor.u32 %v582, 2147483648
        %v833 = vxor.u32 %v586, 2147483648
        %v834 = vxor.u32 %v588, 2147483648
        %v835 = vxor.u32 %v592, 2147483648
        %v836 = vxor.u32 %v594, 2147483648
        %v837 = vxor.u32 %v598, 2147483648
        %v838 = vxor.u32 %v600, 2147483648
        %v839 = vxor.u32 %v604, 2147483648
        %v840 = vxor.u32 %v606, 2147483648
        %v841 = vxor.u32 %v610, 2147483648
        %v842 = vxor.u32 %v612, 2147483648
        %v843 = vxor.u32 %v616, 2147483648
        %v844 = vxor.u32 %v618, 2147483648
        %v845 = vxor.u32 %v622, 2147483648
        %v846 = vxor.u32 %v624, 2147483648
        %v847 = vxor.u32 %v628, 2147483648
        %v848 = vxor.u32 %v630, 2147483648
        %v849 = vxor.u32 %v634, 2147483648
        %v850 = vxor.u32 %v636, 2147483648
        %v851 = vxor.u32 %v640, 2147483648
        %v852 = vxor.u32 %v642, 2147483648
        %v853 = vxor.u32 %v646, 2147483648
        %v854 = vxor.u32 %v648, 2147483648
        %v855 = vxor.u32 %v652, 2147483648
        %v856 = vxor.u32 %v654, 2147483648
        %v857 = vxor.u32 %v658, 2147483648
        %v858 = vxor.u32 %v660, 2147483648
        %v859 = vxor.u32 %v664, 2147483648
        %v860 = vxor.u32 %v666, 2147483648
        %v861 = vmul.f32 %v829, 1.442695
        %v862 = vpow.pop %v861
        %v863 = vmul.f32 %v830, 1.442695
        %v864 = vpow.pop %v863
        %v865 = vmul.f32 %v831, 1.442695
        %v866 = vpow.pop %v865
        %v867 = vmul.f32 %v832, 1.442695
        %v868 = vpow.pop %v867
        %v869 = vmul.f32 %v833, 1.442695
        %v870 = vpow.pop %v869
        %v871 = vmul.f32 %v834, 1.442695
        %v872 = vpow.pop %v871
        %v873 = vmul.f32 %v835, 1.442695
        %v874 = vpow.pop %v873
        %v875 = vmul.f32 %v836, 1.442695
        %v876 = vpow.pop %v875
        %v877 = vmul.f32 %v837, 1.442695
        %v878 = vpow.pop %v877
        %v879 = vmul.f32 %v838, 1.442695
        %v880 = vpow.pop %v879
        %v881 = vmul.f32 %v839, 1.442695
        %v882 = vpow.pop %v881
        %v883 = vmul.f32 %v840, 1.442695
        %v884 = vpow.pop %v883
        %v885 = vmul.f32 %v841, 1.442695
        %v886 = vpow.pop %v885
        %v887 = vmul.f32 %v842, 1.442695
        %v888 = vpow.pop %v887
        %v889 = vmul.f32 %v843, 1.442695
        %v890 = vpow.pop %v889
        %v891 = vmul.f32 %v844, 1.442695
        %v892 = vpow.pop %v891
        %v893 = vmul.f32 %v845, 1.442695
        %v894 = vpow.pop %v893
        %v895 = vmul.f32 %v846, 1.442695
        %v896 = vpow.pop %v895
        %v897 = vmul.f32 %v847, 1.442695
        %v898 = vpow.pop %v897
        %v899 = vmul.f32 %v848, 1.442695
        %v900 = vpow.pop %v899
        %v901 = vmul.f32 %v849, 1.442695
        %v902 = vpow.pop %v901
        %v903 = vmul.f32 %v850, 1.442695
        %v904 = vpow.pop %v903
        %v905 = vmul.f32 %v851, 1.442695
        %v906 = vpow.pop %v905
        %v907 = vmul.f32 %v852, 1.442695
        %v908 = vpow.pop %v907
        %v909 = vmul.f32 %v853, 1.442695
        %v910 = vpow.pop %v909
        %v911 = vmul.f32 %v854, 1.442695
        %v912 = vpow.pop %v911
        %v913 = vmul.f32 %v855, 1.442695
        %v914 = vpow.pop %v913
        %v915 = vmul.f32 %v856, 1.442695
        %v916 = vpow.pop %v915
        %v917 = vmul.f32 %v857, 1.442695
        %v918 = vpow.pop %v917
        %v919 = vmul.f32 %v858, 1.442695
        %v920 = vpow.pop %v919
        %v921 = vmul.f32 %v859, 1.442695
        %v922 = vpow.pop %v921
        %v923 = vmul.f32 %v860, 1.442695
        %v924 = vpow.pop %v923
        %v925 = vadd.f32 %v862, 1.0
        %v926 = vadd.f32 %v864, 1.0
        %v927 = vadd.f32 %v866, 1.0
        %v928 = vadd.f32 %v868, 1.0
        %v929 = vadd.f32 %v870, 1.0
        %v930 = vadd.f32 %v872, 1.0
        %v931 = vadd.f32 %v874, 1.0
        %v932 = vadd.f32 %v876, 1.0
        %v933 = vadd.f32 %v878, 1.0
        %v934 = vadd.f32 %v880, 1.0
        %v935 = vadd.f32 %v882, 1.0
        %v936 = vadd.f32 %v884, 1.0
        %v937 = vadd.f32 %v886, 1.0
        %v938 = vadd.f32 %v888, 1.0
        %v939 = vadd.f32 %v890, 1.0
        %v940 = vadd.f32 %v892, 1.0
        %v941 = vadd.f32 %v894, 1.0
        %v942 = vadd.f32 %v896, 1.0
        %v943 = vadd.f32 %v898, 1.0
        %v944 = vadd.f32 %v900, 1.0
        %v945 = vadd.f32 %v902, 1.0
        %v946 = vadd.f32 %v904, 1.0
        %v947 = vadd.f32 %v906, 1.0
        %v948 = vadd.f32 %v908, 1.0
        %v949 = vadd.f32 %v910, 1.0
        %v950 = vadd.f32 %v912, 1.0
        %v951 = vadd.f32 %v914, 1.0
        %v952 = vadd.f32 %v916, 1.0
        %v953 = vadd.f32 %v918, 1.0
        %v954 = vadd.f32 %v920, 1.0
        %v955 = vadd.f32 %v922, 1.0
        %v956 = vadd.f32 %v924, 1.0
        %v957 = vrcp.pop %v925
        %v958 = vmul.f32 1.0, %v957
        %v959 = vrcp.pop %v926
        %v960 = vmul.f32 1.0, %v959
        %v961 = vrcp.pop %v927
        %v962 = vmul.f32 1.0, %v961
        %v963 = vrcp.pop %v928
        %v964 = vmul.f32 1.0, %v963
        %v965 = vrcp.pop %v929
        %v966 = vmul.f32 1.0, %v965
        %v967 = vrcp.pop %v930
        %v968 = vmul.f32 1.0, %v967
        %v969 = vrcp.pop %v931
        %v970 = vmul.f32 1.0, %v969
        %v971 = vrcp.pop %v932
        %v972 = vmul.f32 1.0, %v971
        %v973 = vrcp.pop %v933
        %v974 = vmul.f32 1.0, %v973
        %v975 = vrcp.pop %v934
        %v976 = vmul.f32 1.0, %v975
        %v977 = vrcp.pop %v935
        %v978 = vmul.f32 1.0, %v977
        %v979 = vrcp.pop %v936
        %v980 = vmul.f32 1.0, %v979
        %v981 = vrcp.pop %v937
        %v982 = vmul.f32 1.0, %v981
        %v983 = vrcp.pop %v938
        %v984 = vmul.f32 1.0, %v983
        %v985 = vrcp.pop %v939
        %v986 = vmul.f32 1.0, %v985
        %v987 = vrcp.pop %v940
        %v988 = vmul.f32 1.0, %v987
        %v989 = vrcp.pop %v941
        %v990 = vmul.f32 1.0, %v989
        %v991 = vrcp.pop %v942
        %v992 = vmul.f32 1.0, %v991
        %v993 = vrcp.pop %v943
        %v994 = vmul.f32 1.0, %v993
        %v995 = vrcp.pop %v944
        %v996 = vmul.f32 1.0, %v995
        %v997 = vrcp.pop %v945
        %v998 = vmul.f32 1.0, %v997
        %v999 = vrcp.pop %v946
        %v1000 = vmul.f32 1.0, %v999
        %v1001 = vrcp.pop %v947
        %v1002 = vmul.f32 1.0, %v1001
        %v1003 = vrcp.pop %v948
        %v1004 = vmul.f32 1.0, %v1003
        %v1005 = vrcp.pop %v949
        %v1006 = vmul.f32 1.0, %v1005
        %v1007 = vrcp.pop %v950
        %v1008 = vmul.f32 1.0, %v1007
        %v1009 = vrcp.pop %v951
        %v1010 = vmul.f32 1.0, %v1009
        %v1011 = vrcp.pop %v952
        %v1012 = vmul.f32 1.0, %v1011
        %v1013 = vrcp.pop %v953
        %v1014 = vmul.f32 1.0, %v1013
        %v1015 = vrcp.pop %v954
        %v1016 = vmul.f32 1.0, %v1015
        %v1017 = vrcp.pop %v955
        %v1018 = vmul.f32 1.0, %v1017
        %v1019 = vrcp.pop %v956
        %v1020 = vmul.f32 1.0, %v1019
        %v1021 = vmul.f32 %v574, %v958
        %v1022 = vmul.f32 %v576, %v960
        %v1023 = vmul.f32 %v580, %v962
        %v1024 = vmul.f32 %v582, %v964
        %v1025 = vmul.f32 %v586, %v966
        %v1026 = vmul.f32 %v588, %v968
        %v1027 = vmul.f32 %v592, %v970
        %v1028 = vmul.f32 %v594, %v972
        %v1029 = vmul.f32 %v598, %v974
        %v1030 = vmul.f32 %v600, %v976
        %v1031 = vmul.f32 %v604, %v978
        %v1032 = vmul.f32 %v606, %v980
        %v1033 = vmul.f32 %v610, %v982
        %v1034 = vmul.f32 %v612, %v984
        %v1035 = vmul.f32 %v616, %v986
        %v1036 = vmul.f32 %v618, %v988
        %v1037 = vmul.f32 %v622, %v990
        %v1038 = vmul.f32 %v624, %v992
        %v1039 = vmul.f32 %v628, %v994
        %v1040 = vmul.f32 %v630, %v996
        %v1041 = vmul.f32 %v634, %v998
        %v1042 = vmul.f32 %v636, %v1000
        %v1043 = vmul.f32 %v640, %v1002
        %v1044 = vmul.f32 %v642, %v1004
        %v1045 = vmul.f32 %v646, %v1006
        %v1046 = vmul.f32 %v648, %v1008
        %v1047 = vmul.f32 %v652, %v1010
        %v1048 = vmul.f32 %v654, %v1012
        %v1049 = vmul.f32 %v658, %v1014
        %v1050 = vmul.f32 %v660, %v1016
        %v1051 = vmul.f32 %v664, %v1018
        %v1052 = vmul.f32 %v666, %v1020
        %v1053 = vmul.f32 %v1021, %v735
        %v1054 = vmul.f32 %v1022, %v737
        %v1055 = vmul.f32 %v1023, %v741
        %v1056 = vmul.f32 %v1024, %v743
        %v1057 = vmul.f32 %v1025, %v747
        %v1058 = vmul.f32 %v1026, %v749
        %v1059 = vmul.f32 %v1027, %v753
        %v1060 = vmul.f32 %v1028, %v755
        %v1061 = vmul.f32 %v1029, %v759
        %v1062 = vmul.f32 %v1030, %v761
        %v1063 = vmul.f32 %v1031, %v765
        %v1064 = vmul.f32 %v1032, %v767
        %v1065 = vmul.f32 %v1033, %v771
        %v1066 = vmul.f32 %v1034, %v773
        %v1067 = vmul.f32 %v1035, %v777
        %v1068 = vmul.f32 %v1036, %v779
        %v1069 = vmul.f32 %v1037, %v783
        %v1070 = vmul.f32 %v1038, %v785
        %v1071 = vmul.f32 %v1039, %v789
        %v1072 = vmul.f32 %v1040, %v791
        %v1073 = vmul.f32 %v1041, %v795
        %v1074 = vmul.f32 %v1042, %v797
        %v1075 = vmul.f32 %v1043, %v801
        %v1076 = vmul.f32 %v1044, %v803
        %v1077 = vmul.f32 %v1045, %v807
        %v1078 = vmul.f32 %v1046, %v809
        %v1079 = vmul.f32 %v1047, %v813
        %v1080 = vmul.f32 %v1048, %v815
        %v1081 = vmul.f32 %v1049, %v819
        %v1082 = vmul.f32 %v1050, %v821
        %v1083 = vmul.f32 %v1051, %v825
        %v1084 = vmul.f32 %v1052, %v827
        %v1085 = vld [vmem:[#allocation2] sm:$0xff]
        %v1086 = vld [vmem:[#allocation2 + $0x8] sm:$0xff]
        %v1087 = vld [vmem:[#allocation2 + $0x10] sm:$0xff]
        %v1088 = vld [vmem:[#allocation2 + $0x18] sm:$0xff]
        %v1089 = vld [vmem:[#allocation2 + $0x20] sm:$0xff]
        %v1090 = vld [vmem:[#allocation2 + $0x28] sm:$0xff]
        %v1091 = vld [vmem:[#allocation2 + $0x30] sm:$0xff]
        %v1092 = vld [vmem:[#allocation2 + $0x38] sm:$0xff]
        %v1093 = vld [vmem:[#allocation2 + $0x40] sm:$0xff]
        %v1094 = vld [vmem:[#allocation2 + $0x48] sm:$0xff]
        %v1095 = vld [vmem:[#allocation2 + $0x50] sm:$0xff]
        %v1096 = vld [vmem:[#allocation2 + $0x58] sm:$0xff]
        %v1097 = vld [vmem:[#allocation2 + $0x60] sm:$0xff]
        %v1098 = vld [vmem:[#allocation2 + $0x68] sm:$0xff]
        %v1099 = vld [vmem:[#allocation2 + $0x70] sm:$0xff]
        %v1100 = vld [vmem:[#allocation2 + $0x78] sm:$0xff]
        %1101 = vmatprep.subr.mxu0 0.0
        %1102 = vmatpush1.msra.mxu0 %v475
        %1103 = vmatprep.subr.mxu0 0.0
        %1104 = vmatpush1.msra.mxu0 %v476
        %1105 = vmatprep.subr.mxu0 0.0
        %1106 = vmatpush1.msra.mxu0 %v477
        %1107 = vmatprep.subr.mxu0 0.0
        %1108 = vmatpush1.msra.mxu0 %v478
        %1109 = vmatprep.subr.mxu0 0.0
        %1110 = vmatpush1.msra.mxu0 %v479
        %1111 = vmatprep.subr.mxu0 0.0
        %1112 = vmatpush1.msra.mxu0 %v480
        %1113 = vmatprep.subr.mxu0 0.0
        %1114 = vmatpush1.msra.mxu0 %v481
        %1115 = vmatprep.subr.mxu0 0.0
        %1116 = vmatpush1.msra.mxu0 %v482
        %1117 = vmatprep.subr.mxu0 0.0
        %1118 = vmatpush1.msra.mxu0 %v483
        %1119 = vmatprep.subr.mxu0 0.0
        %1120 = vmatpush1.msra.mxu0 %v484
        %1121 = vmatprep.subr.mxu0 0.0
        %1122 = vmatpush1.msra.mxu0 %v485
        %1123 = vmatprep.subr.mxu0 0.0
        %1124 = vmatpush1.msra.mxu0 %v486
        %1125 = vmatprep.subr.mxu0 0.0
        %1126 = vmatpush1.msra.mxu0 %v487
        %1127 = vmatprep.subr.mxu0 0.0
        %1128 = vmatpush1.msra.mxu0 %v488
        %1129 = vmatprep.subr.mxu0 0.0
        %1130 = vmatpush1.msra.mxu0 %v489
        %1131 = vmatprep.subr.mxu0 0.0
        %1132 = vmatpush1.msra.mxu0 %v490
        %1133 = vmatprep.subr.mxu0 0.0
        %1134 = vmatpush1.msra.mxu0 %v491
        %1135 = vmatprep.subr.mxu0 0.0
        %1136 = vmatpush1.msra.mxu0 %v492
        %1137 = vmatprep.subr.mxu0 0.0
        %1138 = vmatpush1.msra.mxu0 %v493
        %1139 = vmatprep.subr.mxu0 0.0
        %1140 = vmatpush1.msra.mxu0 %v494
        %1141 = vmatprep.subr.mxu0 0.0
        %1142 = vmatpush1.msra.mxu0 %v495
        %1143 = vmatprep.subr.mxu0 0.0
        %1144 = vmatpush1.msra.mxu0 %v496
        %1145 = vmatprep.subr.mxu0 0.0
        %1146 = vmatpush1.msra.mxu0 %v497
        %1147 = vmatprep.subr.mxu0 0.0
        %1148 = vmatpush1.msra.mxu0 %v498
        %1149 = vmatprep.subr.mxu0 0.0
        %1150 = vmatpush1.msra.mxu0 %v499
        %1151 = vmatprep.subr.mxu0 0.0
        %1152 = vmatpush1.msra.mxu0 %v500
        %1153 = vmatprep.subr.mxu0 0.0
        %1154 = vmatpush1.msra.mxu0 %v501
        %1155 = vmatprep.subr.mxu0 0.0
        %1156 = vmatpush1.msra.mxu0 %v502
        %1157 = vmatprep.subr.mxu0 0.0
        %1158 = vmatpush1.msra.mxu0 %v503
        %1159 = vmatprep.subr.mxu0 0.0
        %1160 = vmatpush1.msra.mxu0 %v504
        %1161 = vmatprep.subr.mxu0 0.0
        %1162 = vmatpush1.msra.mxu0 %v505
        %1163 = vmatprep.subr.mxu0 0.0
        %1164 = vmatpush1.msra.mxu0 %v506
        %1165 = vmatprep.mubr.f32.mxu0 %v1054
        %1166 = vmatmul.mubr.f32.gmra.mrb[0].mxu0 %v1053
        %v1167 = vpop.f32.mrb[0].mxu0
        %v1168 = vadd.f32 0.0, %v1167
        %v1169 = vpop.f32.mrb[0].mxu0
        %1170 = vmatprep.mubr.f32.mxu0 %v1056
        %1171 = vmatmul.mubr.f32.gmra.mrb[0].mxu0 %v1055
        %v1172 = vpop.f32.mrb[0].mxu0
        %v1173 = vadd.f32 0.0, %v1172
        %v1174 = vpop.f32.mrb[0].mxu0
        %1175 = vmatprep.mubr.f32.mxu0 %v1058
        %1176 = vmatmul.mubr.f32.gmra.mrb[0].mxu0 %v1057
        %v1177 = vpop.f32.mrb[0].mxu0
        %v1178 = vadd.f32 0.0, %v1177
        %v1179 = vpop.f32.mrb[0].mxu0
        %1180 = vmatprep.mubr.f32.mxu0 %v1060
        %1181 = vmatmul.mubr.f32.gmra.mrb[0].mxu0 %v1059
        %v1182 = vpop.f32.mrb[0].mxu0
        %v1183 = vadd.f32 0.0, %v1182
        %v1184 = vpop.f32.mrb[0].mxu0
        %1185 = vmatprep.mubr.f32.mxu0 %v1062
        %1186 = vmatmul.mubr.f32.gmra.mrb[0].mxu0 %v1061
        %v1187 = vpop.f32.mrb[0].mxu0
        %v1188 = vadd.f32 0.0, %v1187
        %v1189 = vpop.f32.mrb[0].mxu0
        %1190 = vmatprep.mubr.f32.mxu0 %v1064
        %1191 = vmatmul.mubr.f32.gmra.mrb[0].mxu0 %v1063
        %v1192 = vpop.f32.mrb[0].mxu0
        %v1193 = vadd.f32 0.0, %v1192
        %v1194 = vpop.f32.mrb[0].mxu0
        %1195 = vmatprep.mubr.f32.mxu0 %v1066
        %1196 = vmatmul.mubr.f32.gmra.mrb[0].mxu0 %v1065
        %v1197 = vpop.f32.mrb[0].mxu0
        %v1198 = vadd.f32 0.0, %v1197
        %v1199 = vpop.f32.mrb[0].mxu0
        %1200 = vmatprep.mubr.f32.mxu0 %v1068
        %1201 = vmatmul.mubr.f32.gmra.mrb[0].mxu0 %v1067
        %v1202 = vpop.f32.mrb[0].mxu0
        %v1203 = vadd.f32 0.0, %v1202
        %v1204 = vpop.f32.mrb[0].mxu0
        %1205 = vmatprep.mubr.f32.mxu0 %v1070
        %1206 = vmatmul.mubr.f32.gmra.mrb[0].mxu0 %v1069
        %v1207 = vpop.f32.mrb[0].mxu0
        %v1208 = vadd.f32 0.0, %v1207
        %v1209 = vpop.f32.mrb[0].mxu0
        %1210 = vmatprep.mubr.f32.mxu0 %v1072
        %1211 = vmatmul.mubr.f32.gmra.mrb[0].mxu0 %v1071
        %v1212 = vpop.f32.mrb[0].mxu0
        %v1213 = vadd.f32 0.0, %v1212
        %v1214 = vpop.f32.mrb[0].mxu0
        %1215 = vmatprep.mubr.f32.mxu0 %v1074
        %1216 = vmatmul.mubr.f32.gmra.mrb[0].mxu0 %v1073
        %v1217 = vpop.f32.mrb[0].mxu0
        %v1218 = vadd.f32 0.0, %v1217
        %v1219 = vpop.f32.mrb[0].mxu0
        %1220 = vmatprep.mubr.f32.mxu0 %v1076
        %1221 = vmatmul.mubr.f32.gmra.mrb[0].mxu0 %v1075
        %v1222 = vpop.f32.mrb[0].mxu0
        %v1223 = vadd.f32 0.0, %v1222
        %v1224 = vpop.f32.mrb[0].mxu0
        %1225 = vmatprep.mubr.f32.mxu0 %v1078
        %1226 = vmatmul.mubr.f32.gmra.mrb[0].mxu0 %v1077
        %v1227 = vpop.f32.mrb[0].mxu0
        %v1228 = vadd.f32 0.0, %v1227
        %v1229 = vpop.f32.mrb[0].mxu0
        %1230 = vmatprep.mubr.f32.mxu0 %v1080
        %1231 = vmatmul.mubr.f32.gmra.mrb[0].mxu0 %v1079
        %v1232 = vpop.f32.mrb[0].mxu0
        %v1233 = vadd.f32 0.0, %v1232
        %v1234 = vpop.f32.mrb[0].mxu0
        %1235 = vmatprep.mubr.f32.mxu0 %v1082
        %1236 = vmatmul.mubr.f32.gmra.mrb[0].mxu0 %v1081
        %v1237 = vpop.f32.mrb[0].mxu0
        %v1238 = vadd.f32 0.0, %v1237
        %v1239 = vpop.f32.mrb[0].mxu0
        %1240 = vmatprep.mubr.f32.mxu0 %v1084
        %1241 = vmatmul.mubr.f32.gmra.mrb[0].mxu0 %v1083
        %v1242 = vpop.f32.mrb[0].mxu0
        %v1243 = vadd.f32 0.0, %v1242
        %v1244 = vpop.f32.mrb[0].mxu0
        %1245 = vdwg.mxu0
        %v1246 = vadd.f32 %v1085, %v1168
        %v1247 = vadd.f32 %v1086, %v1173
        %v1248 = vadd.f32 %v1087, %v1178
        %v1249 = vadd.f32 %v1088, %v1183
        %v1250 = vadd.f32 %v1089, %v1188
        %v1251 = vadd.f32 %v1090, %v1193
        %v1252 = vadd.f32 %v1091, %v1198
        %v1253 = vadd.f32 %v1092, %v1203
        %v1254 = vadd.f32 %v1093, %v1208
        %v1255 = vadd.f32 %v1094, %v1213
        %v1256 = vadd.f32 %v1095, %v1218
        %v1257 = vadd.f32 %v1096, %v1223
        %v1258 = vadd.f32 %v1097, %v1228
        %v1259 = vadd.f32 %v1098, %v1233
        %v1260 = vadd.f32 %v1099, %v1238
        %v1261 = vadd.f32 %v1100, %v1243
        %1262 = vst [vmem:[#allocation2] sm:$0xff] %v1246
        %1263 = vst [vmem:[#allocation2 + $0x8] sm:$0xff] %v1247
        %1264 = vst [vmem:[#allocation2 + $0x10] sm:$0xff] %v1248
        %1265 = vst [vmem:[#allocation2 + $0x18] sm:$0xff] %v1249
        %1266 = vst [vmem:[#allocation2 + $0x20] sm:$0xff] %v1250
        %1267 = vst [vmem:[#allocation2 + $0x28] sm:$0xff] %v1251
        %1268 = vst [vmem:[#allocation2 + $0x30] sm:$0xff] %v1252
        %1269 = vst [vmem:[#allocation2 + $0x38] sm:$0xff] %v1253
        %1270 = vst [vmem:[#allocation2 + $0x40] sm:$0xff] %v1254
        %1271 = vst [vmem:[#allocation2 + $0x48] sm:$0xff] %v1255
        %1272 = vst [vmem:[#allocation2 + $0x50] sm:$0xff] %v1256
        %1273 = vst [vmem:[#allocation2 + $0x58] sm:$0xff] %v1257
        %1274 = vst [vmem:[#allocation2 + $0x60] sm:$0xff] %v1258
        %1275 = vst [vmem:[#allocation2 + $0x68] sm:$0xff] %v1259
        %1276 = vst [vmem:[#allocation2 + $0x70] sm:$0xff] %v1260
        %1277 = vst [vmem:[#allocation2 + $0x78] sm:$0xff] %v1261
        // Predicated region
        $region57: #{tpu_custom_call.1} parent=35 // pred_check
          %p1278 = pneg %p375
        $region58: #{tpu_custom_call.1} parent=35 // pred_check_branch
          %1280 = sbr.rel (%p1278) target = $region60
        $region59: #{tpu_custom_call.1} parent=35 // pred_region
          %v1281 = vld [vmem:[#allocation2] sm:$0xff]
          %v1282 = vld [vmem:[#allocation2 + $0x8] sm:$0xff]
          %v1283 = vld [vmem:[#allocation2 + $0x10] sm:$0xff]
          %v1284 = vld [vmem:[#allocation2 + $0x18] sm:$0xff]
          %v1285 = vld [vmem:[#allocation2 + $0x20] sm:$0xff]
          %v1286 = vld [vmem:[#allocation2 + $0x28] sm:$0xff]
          %v1287 = vld [vmem:[#allocation2 + $0x30] sm:$0xff]
          %v1288 = vld [vmem:[#allocation2 + $0x38] sm:$0xff]
          %v1289 = vld [vmem:[#allocation2 + $0x40] sm:$0xff]
          %v1290 = vld [vmem:[#allocation2 + $0x48] sm:$0xff]
          %v1291 = vld [vmem:[#allocation2 + $0x50] sm:$0xff]
          %v1292 = vld [vmem:[#allocation2 + $0x58] sm:$0xff]
          %v1293 = vld [vmem:[#allocation2 + $0x60] sm:$0xff]
          %v1294 = vld [vmem:[#allocation2 + $0x68] sm:$0xff]
          %v1295 = vld [vmem:[#allocation2 + $0x70] sm:$0xff]
          %v1296 = vld [vmem:[#allocation2 + $0x78] sm:$0xff]
          %1297 = vst [vmem:[%s369] sm:$0xff] %v1281
          %1298 = vst [vmem:[%s369 + $0x8] sm:$0xff] %v1282
          %1299 = vst [vmem:[%s369 + $0x10] sm:$0xff] %v1283
          %1300 = vst [vmem:[%s369 + $0x18] sm:$0xff] %v1284
          %1301 = vst [vmem:[%s369 + $0x20] sm:$0xff] %v1285
          %1302 = vst [vmem:[%s369 + $0x28] sm:$0xff] %v1286
          %1303 = vst [vmem:[%s369 + $0x30] sm:$0xff] %v1287
          %1304 = vst [vmem:[%s369 + $0x38] sm:$0xff] %v1288
          %1305 = vst [vmem:[%s369 + $0x40] sm:$0xff] %v1289
          %1306 = vst [vmem:[%s369 + $0x48] sm:$0xff] %v1290
          %1307 = vst [vmem:[%s369 + $0x50] sm:$0xff] %v1291
          %1308 = vst [vmem:[%s369 + $0x58] sm:$0xff] %v1292
          %1309 = vst [vmem:[%s369 + $0x60] sm:$0xff] %v1293
          %1310 = vst [vmem:[%s369 + $0x68] sm:$0xff] %v1294
          %1311 = vst [vmem:[%s369 + $0x70] sm:$0xff] %v1295
          %1312 = vst [vmem:[%s369 + $0x78] sm:$0xff] %v1296
        $region60: #{tpu_custom_call.1} parent=35 // pred_fallthru
          _
        %s1313 = sand.u32 %s168, 1
        %s1314 = scalar_lea.sflag [#allocation5], %s1313
        %s1315 = sand.u32 %s168, 1
        %s1316 = smul.addr %s1315, 128
        %s1317 = scalar_lea.vmem [#allocation11], %s1316
        // Predicated region
        $region61: #{tpu_custom_call.1} parent=35 // pred_check
          %p1318 = pneg %p178
        $region62: #{tpu_custom_call.1} parent=35 // pred_check_branch
          %1320 = sbr.rel (%p1318) target = $region64
        $region63: #{tpu_custom_call.1} parent=35 // pred_region
          %s1321 = smul.u32 16, %s33
          %s1323 = ssub.s32 2048, 2048
          %1324 = vsyncadd %s1314, %s1323
          %s1325 = smul.addr %s32, 16
          %s1326 = sadd.s32 %s1321, %s1325
          %s1327 = smul.addr %s1326, 128
          %s1328 = scalar_lea.hbm %s4, %s1327
          %s1329 = sshll.u32 %s1317, 4
          %s1330 = int_to_ptr.vmem [resolvable:$true] %s1329
          %1335 = dma.vmem_to_hbm [thread:$0]  %s1330, 2048, %s1328, %s1314, 128, 128, 8
        $region64: #{tpu_custom_call.1} parent=35 // pred_fallthru
          _
      $region36: #{tpu_custom_call.1} parent=5 // pred_fallthru
        _
      %p1336 = scmp.le.s32.totalorder 2, %s22
      // Predicated region
      $region65: #{tpu_custom_call.1} parent=5 // pred_check
        %p1337 = pneg %p1336
      $region66: #{tpu_custom_call.1} parent=5 // pred_check_branch
        %1339 = sbr.rel (%p1337) target = $region68
      $region67: #{tpu_custom_call.1} parent=5 // pred_region
        %s1340 = ssub.s32 %s22, 2
        // Predicated region
        $region69: #{tpu_custom_call.1} parent=67 // pred_check
          %p1341 = pneg %p184
        $region70: #{tpu_custom_call.1} parent=67 // pred_check_branch
          %1343 = sbr.rel (%p1341) target = $region72
        $region71: #{tpu_custom_call.1} parent=67 // pred_region
          %s1344 = sand.u32 %s169, 1
          %s1345 = scalar_lea.sflag [#allocation5], %s1344
          %s1346 = sand.u32 %s169, 1
          %s1347 = smul.addr %s1346, 128
          %s1348 = scalar_lea.vmem [#allocation11], %s1347
          %1349 = dma.done %s1345, 2048
        $region72: #{tpu_custom_call.1} parent=67 // pred_fallthru
          _
      $region68: #{tpu_custom_call.1} parent=5 // pred_fallthru
        _
    $region6: #{tpu_custom_call.1} parent=1 // loop_footer
      %s26 = sadd.s32 1, %s22
    $region7: #{tpu_custom_call.1} parent=1 // loop_footer_branch
      %21 = sbr.rel target = $region3
    $region8: #{tpu_custom_call.1} parent=1 // loop_exit
      _
    %1350 = vsyncpa [#allocation4], 1
    %s1351 = scalar_lea.sflag [#allocation4], 1
    %1352 = vsyncpa %s1351, 1
    %1353 = vsyncpa [#allocation7], 1
    %s1354 = scalar_lea.sflag [#allocation7], 1
    %1355 = vsyncpa %s1354, 1
    %1356 = vsyncpa [#allocation10], 1
    %s1357 = scalar_lea.sflag [#allocation10], 1
    %1358 = vsyncpa %s1357, 1
    %1359 = vsyncpa [#allocation5], 1
    %s1360 = scalar_lea.sflag [#allocation5], 1
    %1361 = vsyncpa %s1360, 1

</llo_original>
